<compile_context>
chip_gen: v7x
topology: tpu7x:2x2x1
jax: 0.10.0
libtpu: 0.0.40
codegen_flags: <defaults>
</compile_context>

<pallas_src>
import functools

import jax
import jax.numpy as jnp
from jax import lax
from jax.experimental import pallas as pl
from jax.experimental.pallas import tpu as pltpu


def _layernorm(y, gamma, beta, eps=1e-5):
    # PyTorch nn.LayerNorm: biased variance over last dim, f32 math, rsqrt on EUP.
    mu = jnp.mean(y, axis=-1, keepdims=True)
    var = jnp.mean((y - mu) ** 2, axis=-1, keepdims=True)
    return (y - mu) * lax.rsqrt(var + eps) * gamma + beta


def transformer_kernel(x_ref, hm_ref, wqkv_ref, wo_ref, bo_ref, g1_ref, be1_ref,
                       w1_ref, b1_ref, w2_ref, b2_ref, g2_ref, be2_ref,
                       o_ref, *, heads, seq, embed, sp, exact_div):
    """One (batch, layer) step; activation carried in o_ref across layers."""
    layer = pl.program_id(1)

    # Layer 0 for this batch: load the embedded input into the resident buffer.
    @pl.when(layer == 0)
    def _init():
        o_ref[...] = x_ref[...]

    x = o_ref[0]                                  # (S, E) f32
    xb = x.astype(jnp.bfloat16)

    # ---- fused QKV projection (one MXU push; 1/sqrt(E) scale folded into Q;
    #      Q/K/V sections start at 128-lane-aligned columns) ----
    qkv = jnp.dot(xb, wqkv_ref[0], preferred_element_type=jnp.float32)  # (S, 3*SP)
    q = qkv[:, 0:embed].astype(jnp.bfloat16)
    kb = qkv[:, sp:sp + embed].astype(jnp.bfloat16)
    vb = qkv[:, 2 * sp:2 * sp + embed].astype(jnp.bfloat16)

    # ---- all-head attention, no per-head loop, no concat ----
    # hm_ref: (H, 1, E) bf16 precomputed head-feature mask (constant across grid).
    hm = hm_ref[...]
    hs = heads * seq
    k_exp = (kb[None, :, :] * hm).reshape(hs, embed)   # (H*S, E) bf16, masked per head
    v_exp = (vb[None, :, :] * hm).reshape(hs, embed)

    # Scores for all heads in one matmul, keys on sublanes:
    #   s[h*S + j, i] = <q_i, k_j> restricted to head h's features.
    s = lax.dot_general(k_exp, q, (((1,), (1,)), ((), ())),
                        preferred_element_type=jnp.float32)            # (H*S, S)
    s3 = s.reshape(heads, seq, seq)               # (H, Sk, Sq): leading split, no relayout

    # Segmented (per-head) numerically-stable softmax over the key axis.
    mx = jnp.max(s3, axis=1, keepdims=True)                            # (H, 1, Sq)
    p3 = jnp.exp(s3 - mx)
    denom = jnp.sum(p3, axis=1, keepdims=True)                         # (H, 1, Sq)
    if exact_div:
        p3 = p3 / denom                       # exact path for strict parity checks
    else:
        p3 = p3 * pl.reciprocal(denom, approx=True)   # denom >= 1 after per-head max
    p = p3.reshape(hs, seq).astype(jnp.bfloat16)                       # (H*S, Sq)

    # Context for all heads: ctx[i, e] = sum_{h,j} p[h*S+j, i] * v_exp[h*S+j, e].
    ctx = lax.dot_general(p, v_exp, (((0,), (0,)), ((), ())),
                          preferred_element_type=jnp.float32)          # (S, E)

    # ---- fc_out + residual + LayerNorm 1 (dropout = identity, eval mode) ----
    attn = jnp.dot(ctx.astype(jnp.bfloat16), wo_ref[0],
                   preferred_element_type=jnp.float32) + bo_ref[0]
    x1 = _layernorm(attn + x, g1_ref[0], be1_ref[0])

    # ---- FeedForward: relu(x @ W1 + b1) @ W2 + b2 ----
    h1 = jnp.maximum(jnp.dot(x1.astype(jnp.bfloat16), w1_ref[0],
                             preferred_element_type=jnp.float32) + b1_ref[0], 0.0)
    ff = jnp.dot(h1.astype(jnp.bfloat16), w2_ref[0],
                 preferred_element_type=jnp.float32) + b2_ref[0]

    # ---- residual + LayerNorm 2 ----
    o_ref[0] = _layernorm(ff + x1, g2_ref[0], be2_ref[0])


def simplified_transformer(tokens, params, heads, *, exact_div=False):
    B, S = tokens.shape
    E = params["embed"].shape[1]
    L = params["wqkv"].shape[0]
    SP = params["wqkv"].shape[2] // 3
    F = params["w1"].shape[2]

    # Embedding gather + positional add (plain-JAX glue); dropout = identity (eval).
    emb = jnp.take(params["embed"], tokens, axis=0) + params["pos"][:, :S, :]
    x = emb.astype(jnp.float32)                               # (B, S, E)

    kern = functools.partial(transformer_kernel, heads=heads, seq=S, embed=E,
                             sp=SP, exact_div=exact_div)

    def wspec(shape):                      # per-layer weights: indexed by layer axis
        nd = len(shape)
        return pl.BlockSpec((1,) + shape, lambda b, l, _n=nd: (l,) + (0,) * _n)

    act_spec = pl.BlockSpec((1, S, E), lambda b, l: (b, 0, 0))  # const across l -> resident
    mask_spec = pl.BlockSpec((heads, 1, E), lambda b, l: (0, 0, 0))  # grid-constant

    grid_spec = pltpu.PrefetchScalarGridSpec(
        num_scalar_prefetch=0,
        grid=(B, L),                                       # batch outer, layers inner
        in_specs=[
            act_spec,                                      # embedded input (read at l==0)
            mask_spec,                                     # head-feature mask (bf16)
            wspec((E, 3 * SP)),                            # fused Wqkv (bf16, padded cols)
            wspec((E, E)),                                 # Wo^T (bf16)
            wspec((1, E)),                                 # bo
            wspec((1, E)), wspec((1, E)),                  # gamma1, beta1
            wspec((E, F)), wspec((1, F)),                  # W1^T (bf16), b1
            wspec((F, E)), wspec((1, E)),                  # W2^T (bf16), b2
            wspec((1, E)), wspec((1, E)),                  # gamma2, beta2
        ],
        out_specs=act_spec,                                # activation carrier per batch
    )

    out = pl.pallas_call(
        kern,
        out_shape=jax.ShapeDtypeStruct((B, S, E), jnp.float32),
        grid_spec=grid_spec,
        compiler_params=pltpu.CompilerParams(
            dimension_semantics=("parallel", "arbitrary"),  # batch sharded, layers sequential
            vmem_limit_bytes=32 * 1024 * 1024),
    )(x, params["head_mask"], params["wqkv"], params["wo"], params["bo"],
      params["g1"], params["be1"], params["w1"], params["b1"],
      params["w2"], params["b2"], params["g2"], params["be2"])

    return out


def init_params(key, vocab, E, num_layers, heads, F, max_len):
    Dh = E // heads
    SP = ((E + 127) // 128) * 128              # 128-lane-aligned section width for Q/K/V
    keys = jax.random.split(key, 1 + num_layers)
    eye = jnp.eye(heads, dtype=jnp.float32)
    scale = 1.0 / (float(E) ** 0.5)            # softmax(energy / sqrt(embed_size))

    wqkv_l, wo_l, bo_l, w1_l, b1_l, w2_l, b2_l = [], [], [], [], [], [], []
    for li in range(num_layers):
        lk = jax.random.split(keys[1 + li], 9)
        wq = 0.1 * jax.random.normal(lk[0], (Dh, Dh), jnp.float32)   # nn.Linear(Dh, Dh, bias=False)
        wk = 0.1 * jax.random.normal(lk[1], (Dh, Dh), jnp.float32)
        wv = 0.1 * jax.random.normal(lk[2], (Dh, Dh), jnp.float32)
        wo = 0.1 * jax.random.normal(lk[3], (E, E), jnp.float32)     # fc_out weight (out,in)
        bo = 0.1 * jax.random.normal(lk[4], (E,), jnp.float32)
        w1 = 0.1 * jax.random.normal(lk[5], (F, E), jnp.float32)     # linear1 weight (out,in)
        b1 = 0.1 * jax.random.normal(lk[6], (F,), jnp.float32)
        w2 = 0.1 * jax.random.normal(lk[7], (E, F), jnp.float32)     # linear2 weight (out,in)
        b2 = 0.1 * jax.random.normal(lk[8], (E,), jnp.float32)
        # Same (Dh,Dh) weight shared by every head -> block-diagonal (E,E);
        # fuse Q|K|V into one weight with 128-aligned sections; fold the
        # attention scale into the Q block.
        wqkv = jnp.zeros((E, 3 * SP), jnp.float32)
        wqkv = wqkv.at[:, 0:E].set(jnp.kron(eye, wq.T) * scale)
        wqkv = wqkv.at[:, SP:SP + E].set(jnp.kron(eye, wk.T))
        wqkv = wqkv.at[:, 2 * SP:2 * SP + E].set(jnp.kron(eye, wv.T))
        wqkv_l.append(wqkv)
        wo_l.append(wo.T)
        bo_l.append(bo.reshape(1, E))
        w1_l.append(w1.T)
        b1_l.append(b1.reshape(1, F))
        w2_l.append(w2.T)
        b2_l.append(b2.reshape(1, E))

    # Layer-invariant head-feature mask (H, 1, E): 1 where feature e belongs to head h.
    col_head = jnp.arange(E, dtype=jnp.int32) // Dh
    head_mask = (jnp.arange(heads, dtype=jnp.int32)[:, None] == col_head[None, :])
    head_mask = head_mask.astype(jnp.bfloat16).reshape(heads, 1, E)

    L = num_layers
    return {
        "embed": 0.02 * jax.random.normal(keys[0], (vocab, E), jnp.float32),
        "pos": jnp.zeros((1, max_len, E), jnp.float32),   # nn.Parameter(torch.zeros(...))
        "head_mask": head_mask,                           # (H, 1, E) bf16 constant
        "wqkv": jnp.stack(wqkv_l).astype(jnp.bfloat16),   # (L, E, 3*SP)
        "wo": jnp.stack(wo_l).astype(jnp.bfloat16),       # (L, E, E)
        "bo": jnp.stack(bo_l),                            # (L, 1, E)
        "g1": jnp.ones((L, 1, E), jnp.float32),
        "be1": jnp.zeros((L, 1, E), jnp.float32),
        "w1": jnp.stack(w1_l).astype(jnp.bfloat16),       # (L, E, F)
        "b1": jnp.stack(b1_l),                            # (L, 1, F)
        "w2": jnp.stack(w2_l).astype(jnp.bfloat16),       # (L, F, E)
        "b2": jnp.stack(b2_l),                            # (L, 1, E)
        "g2": jnp.ones((L, 1, E), jnp.float32),
        "be2": jnp.zeros((L, 1, E), jnp.float32),
    }


if __name__ == "__main__":
    vocab_size, embed_size, num_layers, heads, ff_dim, max_len = 50, 32, 2, 4, 64, 16
    B, S = 2, 8

    key = jax.random.PRNGKey(0)
    pkey, xkey = jax.random.split(key)
    params = init_params(pkey, vocab_size, embed_size, num_layers, heads, ff_dim, max_len)
    tokens = jax.random.randint(xkey, (B, S), 0, vocab_size, dtype=jnp.int32)

    out = simplified_transformer(tokens, params, heads)
    jax.block_until_ready(out)
    assert out.shape == (B, S, embed_size) and out.dtype == jnp.float32
    print("KERNEL_OK")
</pallas_src>

<mosaic_0001>
module attributes {stable_mosaic.version = 11 : i64} {
  func.func @transformer_kernel(%arg0: i32, %arg1: i32, %arg2: memref<1x8x32xf32, #tpu.memory_space<vmem>>, %arg3: memref<4x1x32xbf16, #tpu.memory_space<vmem>>, %arg4: memref<1x32x384xbf16, #tpu.memory_space<vmem>>, %arg5: memref<1x32x32xbf16, #tpu.memory_space<vmem>>, %arg6: memref<1x1x32xf32, #tpu.memory_space<vmem>>, %arg7: memref<1x1x32xf32, #tpu.memory_space<vmem>>, %arg8: memref<1x1x32xf32, #tpu.memory_space<vmem>>, %arg9: memref<1x32x64xbf16, #tpu.memory_space<vmem>>, %arg10: memref<1x1x64xf32, #tpu.memory_space<vmem>>, %arg11: memref<1x64x32xbf16, #tpu.memory_space<vmem>>, %arg12: memref<1x1x32xf32, #tpu.memory_space<vmem>>, %arg13: memref<1x1x32xf32, #tpu.memory_space<vmem>>, %arg14: memref<1x1x32xf32, #tpu.memory_space<vmem>>, %arg15: memref<1x8x32xf32, #tpu.memory_space<vmem>>) attributes {dimension_semantics = [#tpu.dimension_semantics<parallel>, #tpu.dimension_semantics<arbitrary>], iteration_bounds = array<i64: 2, 2>, scalar_prefetch = 0 : i64, scratch_operands = 0 : i64, tpu.core_type = #tpu.core_type<tc>, window_params = [{transform_indices = @transform_0, window_bounds = array<i64: 1, 8, 32>}, {pipeline_mode = #tpu.pipeline_mode<synchronous>, transform_indices = @transform_1, window_bounds = array<i64: 4, 1, 32>}, {transform_indices = @transform_2, window_bounds = array<i64: 1, 32, 384>}, {transform_indices = @transform_3, window_bounds = array<i64: 1, 32, 32>}, {transform_indices = @transform_4, window_bounds = array<i64: 1, 1, 32>}, {transform_indices = @transform_5, window_bounds = array<i64: 1, 1, 32>}, {transform_indices = @transform_6, window_bounds = array<i64: 1, 1, 32>}, {transform_indices = @transform_7, window_bounds = array<i64: 1, 32, 64>}, {transform_indices = @transform_8, window_bounds = array<i64: 1, 1, 64>}, {transform_indices = @transform_9, window_bounds = array<i64: 1, 64, 32>}, {transform_indices = @transform_10, window_bounds = array<i64: 1, 1, 32>}, {transform_indices = @transform_11, window_bounds = array<i64: 1, 1, 32>}, {transform_indices = @transform_12, window_bounds = array<i64: 1, 1, 32>}, {transform_indices = @transform_13, window_bounds = array<i64: 1, 8, 32>}]} {
    %c0_i32 = arith.constant 0 : i32
    %0 = arith.cmpi eq, %arg1, %c0_i32 : i32
    %1 = arith.extui %0 : i1 to i32
    %c0_i32_0 = arith.constant 0 : i32
    %2 = arith.cmpi ne, %1, %c0_i32_0 : i32
    scf.if %2 {
      %c0_60 = arith.constant 0 : index
      %c0_61 = arith.constant 0 : index
      %c0_62 = arith.constant 0 : index
      %124 = vector.load %arg2[%c0_60, %c0_61, %c0_62] : memref<1x8x32xf32, #tpu.memory_space<vmem>>, vector<1x8x32xf32>
      %c0_63 = arith.constant 0 : index
      %c0_64 = arith.constant 0 : index
      %c0_65 = arith.constant 0 : index
      %125 = vector.load %arg15[%c0_63, %c0_64, %c0_65] : memref<1x8x32xf32, #tpu.memory_space<vmem>>, vector<1x8x32xf32>
      tpu.vector_store %arg15[%c0_63, %c0_64, %c0_65], %124 {strides = array<i32>} : memref<1x8x32xf32, #tpu.memory_space<vmem>>, vector<1x8x32xf32>,
    } else {
    }
    %c0 = arith.constant 0 : index
    %c0_1 = arith.constant 0 : index
    %c0_2 = arith.constant 0 : index
    %3 = vector.load %arg15[%c0, %c0_1, %c0_2] : memref<1x8x32xf32, #tpu.memory_space<vmem>>, vector<1x8x32xf32>
    %4 = vector.shape_cast %3 : vector<1x8x32xf32> to vector<8x32xf32>
    %5 = arith.truncf %4 : vector<8x32xf32> to vector<8x32xbf16>
    %c0_3 = arith.constant 0 : index
    %c0_4 = arith.constant 0 : index
    %c0_5 = arith.constant 0 : index
    %6 = vector.load %arg4[%c0_3, %c0_4, %c0_5] : memref<1x32x384xbf16, #tpu.memory_space<vmem>>, vector<1x32x384xbf16>
    %7 = vector.shape_cast %6 : vector<1x32x384xbf16> to vector<32x384xbf16>
    %cst = arith.constant dense<0.000000e+00> : vector<8x384xf32>
    %8 = tpu.matmul %5, %7, %cst {dimension_numbers = #tpu.dot_dimension_numbers<[1], [0], [0], [1], [0, 0, 1, 1], [], []>} : vector<8x32xbf16>, vector<32x384xbf16>, vector<8x384xf32> -> vector<8x384xf32>
    %9 = vector.extract_strided_slice %8 {offsets = [0, 0], sizes = [8, 32], strides = [1, 1]} : vector<8x384xf32> to vector<8x32xf32>
    %10 = arith.truncf %9 : vector<8x32xf32> to vector<8x32xbf16>
    %11 = vector.extract_strided_slice %8 {offsets = [0, 128], sizes = [8, 32], strides = [1, 1]} : vector<8x384xf32> to vector<8x32xf32>
    %12 = arith.truncf %11 : vector<8x32xf32> to vector<8x32xbf16>
    %13 = vector.extract_strided_slice %8 {offsets = [0, 256], sizes = [8, 32], strides = [1, 1]} : vector<8x384xf32> to vector<8x32xf32>
    %14 = arith.truncf %13 : vector<8x32xf32> to vector<8x32xbf16>
    %c0_6 = arith.constant 0 : index
    %c0_7 = arith.constant 0 : index
    %c0_8 = arith.constant 0 : index
    %15 = vector.load %arg3[%c0_6, %c0_7, %c0_8] : memref<4x1x32xbf16, #tpu.memory_space<vmem>>, vector<4x1x32xbf16>
    %16 = vector.shape_cast %12 : vector<8x32xbf16> to vector<1x8x32xbf16>
    %17 = vector.broadcast %16 : vector<1x8x32xbf16> to vector<4x8x32xbf16>
    %18 = vector.broadcast %15 : vector<4x1x32xbf16> to vector<4x8x32xbf16>
    %19 = arith.mulf %17, %18 : vector<4x8x32xbf16>
    %20 = vector.shape_cast %19 : vector<4x8x32xbf16> to vector<32x32xbf16>
    %21 = vector.shape_cast %14 : vector<8x32xbf16> to vector<1x8x32xbf16>
    %22 = vector.broadcast %21 : vector<1x8x32xbf16> to vector<4x8x32xbf16>
    %23 = vector.broadcast %15 : vector<4x1x32xbf16> to vector<4x8x32xbf16>
    %24 = arith.mulf %22, %23 : vector<4x8x32xbf16>
    %25 = vector.shape_cast %24 : vector<4x8x32xbf16> to vector<32x32xbf16>
    %cst_9 = arith.constant dense<0.000000e+00> : vector<32x8xf32>
    %26 = tpu.matmul %20, %10, %cst_9 {dimension_numbers = #tpu.dot_dimension_numbers<[1], [1], [0], [0], [0, 0, 1, 0], [], []>} : vector<32x32xbf16>, vector<8x32xbf16>, vector<32x8xf32> -> vector<32x8xf32>
    %27 = vector.shape_cast %26 : vector<32x8xf32> to vector<4x8x8xf32>
    %cst_10 = arith.constant dense<0xFF800000> : vector<4x8xf32>
    %28 = vector.multi_reduction <maximumf>, %27, %cst_10 [1] : vector<4x8x8xf32> to vector<4x8xf32>
    %29 = vector.shape_cast %28 : vector<4x8xf32> to vector<4x1x8xf32>
    %30 = vector.broadcast %29 : vector<4x1x8xf32> to vector<4x8x8xf32>
    %31 = arith.subf %27, %30 : vector<4x8x8xf32>
    %32 = math.exp %31 : vector<4x8x8xf32>
    %cst_11 = arith.constant dense<0.000000e+00> : vector<4x8xf32>
    %33 = vector.multi_reduction <add>, %32, %cst_11 [1] : vector<4x8x8xf32> to vector<4x8xf32>
    %34 = vector.shape_cast %33 : vector<4x8xf32> to vector<4x1x8xf32>
    %35 = tpu.reciprocal %34 {approx = true} : vector<4x1x8xf32> -> vector<4x1x8xf32>
    %36 = vector.broadcast %35 : vector<4x1x8xf32> to vector<4x8x8xf32>
    %37 = arith.mulf %32, %36 : vector<4x8x8xf32>
    %38 = vector.shape_cast %37 : vector<4x8x8xf32> to vector<32x8xf32>
    %39 = arith.truncf %38 : vector<32x8xf32> to vector<32x8xbf16>
    %cst_12 = arith.constant dense<0.000000e+00> : vector<8x32xf32>
    %40 = tpu.matmul %39, %25, %cst_12 {dimension_numbers = #tpu.dot_dimension_numbers<[0], [0], [1], [1], [0, 1, 1, 1], [], []>} : vector<32x8xbf16>, vector<32x32xbf16>, vector<8x32xf32> -> vector<8x32xf32>
    %41 = arith.truncf %40 : vector<8x32xf32> to vector<8x32xbf16>
    %c0_13 = arith.constant 0 : index
    %c0_14 = arith.constant 0 : index
    %c0_15 = arith.constant 0 : index
    %42 = vector.load %arg5[%c0_13, %c0_14, %c0_15] : memref<1x32x32xbf16, #tpu.memory_space<vmem>>, vector<1x32x32xbf16>
    %43 = vector.shape_cast %42 : vector<1x32x32xbf16> to vector<32x32xbf16>
    %cst_16 = arith.constant dense<0.000000e+00> : vector<8x32xf32>
    %44 = tpu.matmul %41, %43, %cst_16 {dimension_numbers = #tpu.dot_dimension_numbers<[1], [0], [0], [1], [0, 0, 1, 1], [], []>} : vector<8x32xbf16>, vector<32x32xbf16>, vector<8x32xf32> -> vector<8x32xf32>
    %c0_17 = arith.constant 0 : index
    %c0_18 = arith.constant 0 : index
    %c0_19 = arith.constant 0 : index
    %45 = vector.load %arg6[%c0_17, %c0_18, %c0_19] : memref<1x1x32xf32, #tpu.memory_space<vmem>>, vector<1x1x32xf32>
    %46 = vector.shape_cast %45 : vector<1x1x32xf32> to vector<1x32xf32>
    %47 = vector.broadcast %46 : vector<1x32xf32> to vector<8x32xf32>
    %48 = arith.addf %44, %47 : vector<8x32xf32>
    %49 = arith.addf %48, %4 : vector<8x32xf32>
    %c0_20 = arith.constant 0 : index
    %c0_21 = arith.constant 0 : index
    %c0_22 = arith.constant 0 : index
    %50 = vector.load %arg7[%c0_20, %c0_21, %c0_22] : memref<1x1x32xf32, #tpu.memory_space<vmem>>, vector<1x1x32xf32>
    %51 = vector.shape_cast %50 : vector<1x1x32xf32> to vector<1x32xf32>
    %c0_23 = arith.constant 0 : index
    %c0_24 = arith.constant 0 : index
    %c0_25 = arith.constant 0 : index
    %52 = vector.load %arg8[%c0_23, %c0_24, %c0_25] : memref<1x1x32xf32, #tpu.memory_space<vmem>>, vector<1x1x32xf32>
    %53 = vector.shape_cast %52 : vector<1x1x32xf32> to vector<1x32xf32>
    %cst_26 = arith.constant dense<0.000000e+00> : vector<8xf32>
    %54 = vector.multi_reduction <add>, %49, %cst_26 [1] : vector<8x32xf32> to vector<8xf32>
    %55 = vector.shape_cast %54 : vector<8xf32> to vector<8x1xf32>
    %cst_27 = arith.constant 3.200000e+01 : f32
    %56 = vector.broadcast %cst_27 : f32 to vector<8x1xf32>
    %57 = arith.divf %55, %56 : vector<8x1xf32>
    %58 = vector.broadcast %57 : vector<8x1xf32> to vector<8x32xf32>
    %59 = arith.subf %49, %58 : vector<8x32xf32>
    %60 = arith.mulf %59, %59 : vector<8x32xf32>
    %cst_28 = arith.constant dense<0.000000e+00> : vector<8xf32>
    %61 = vector.multi_reduction <add>, %60, %cst_28 [1] : vector<8x32xf32> to vector<8xf32>
    %62 = vector.shape_cast %61 : vector<8xf32> to vector<8x1xf32>
    %cst_29 = arith.constant 3.200000e+01 : f32
    %63 = vector.broadcast %cst_29 : f32 to vector<8x1xf32>
    %64 = arith.divf %62, %63 : vector<8x1xf32>
    %65 = vector.broadcast %57 : vector<8x1xf32> to vector<8x32xf32>
    %66 = arith.subf %49, %65 : vector<8x32xf32>
    %cst_30 = arith.constant 9.99999974E-6 : f32
    %67 = vector.broadcast %cst_30 : f32 to vector<8x1xf32>
    %68 = arith.addf %64, %67 : vector<8x1xf32>
    %69 = math.rsqrt %68 : vector<8x1xf32>
    %70 = vector.broadcast %69 : vector<8x1xf32> to vector<8x32xf32>
    %71 = arith.mulf %66, %70 : vector<8x32xf32>
    %72 = vector.broadcast %51 : vector<1x32xf32> to vector<8x32xf32>
    %73 = arith.mulf %71, %72 : vector<8x32xf32>
    %74 = vector.broadcast %53 : vector<1x32xf32> to vector<8x32xf32>
    %75 = arith.addf %73, %74 : vector<8x32xf32>
    %76 = arith.truncf %75 : vector<8x32xf32> to vector<8x32xbf16>
    %c0_31 = arith.constant 0 : index
    %c0_32 = arith.constant 0 : index
    %c0_33 = arith.constant 0 : index
    %77 = vector.load %arg9[%c0_31, %c0_32, %c0_33] : memref<1x32x64xbf16, #tpu.memory_space<vmem>>, vector<1x32x64xbf16>
    %78 = vector.shape_cast %77 : vector<1x32x64xbf16> to vector<32x64xbf16>
    %cst_34 = arith.constant dense<0.000000e+00> : vector<8x64xf32>
    %79 = tpu.matmul %76, %78, %cst_34 {dimension_numbers = #tpu.dot_dimension_numbers<[1], [0], [0], [1], [0, 0, 1, 1], [], []>} : vector<8x32xbf16>, vector<32x64xbf16>, vector<8x64xf32> -> vector<8x64xf32>
    %c0_35 = arith.constant 0 : index
    %c0_36 = arith.constant 0 : index
    %c0_37 = arith.constant 0 : index
    %80 = vector.load %arg10[%c0_35, %c0_36, %c0_37] : memref<1x1x64xf32, #tpu.memory_space<vmem>>, vector<1x1x64xf32>
    %81 = vector.shape_cast %80 : vector<1x1x64xf32> to vector<1x64xf32>
    %82 = vector.broadcast %81 : vector<1x64xf32> to vector<8x64xf32>
    %83 = arith.addf %79, %82 : vector<8x64xf32>
    %cst_38 = arith.constant 0.000000e+00 : f32
    %84 = vector.broadcast %cst_38 : f32 to vector<8x64xf32>
    %85 = arith.maximumf %83, %84 : vector<8x64xf32>
    %86 = arith.truncf %85 : vector<8x64xf32> to vector<8x64xbf16>
    %c0_39 = arith.constant 0 : index
    %c0_40 = arith.constant 0 : index
    %c0_41 = arith.constant 0 : index
    %87 = vector.load %arg11[%c0_39, %c0_40, %c0_41] : memref<1x64x32xbf16, #tpu.memory_space<vmem>>, vector<1x64x32xbf16>
    %88 = vector.shape_cast %87 : vector<1x64x32xbf16> to vector<64x32xbf16>
    %cst_42 = arith.constant dense<0.000000e+00> : vector<8x32xf32>
    %89 = tpu.matmul %86, %88, %cst_42 {dimension_numbers = #tpu.dot_dimension_numbers<[1], [0], [0], [1], [0, 0, 1, 1], [], []>} : vector<8x64xbf16>, vector<64x32xbf16>, vector<8x32xf32> -> vector<8x32xf32>
    %c0_43 = arith.constant 0 : index
    %c0_44 = arith.constant 0 : index
    %c0_45 = arith.constant 0 : index
    %90 = vector.load %arg12[%c0_43, %c0_44, %c0_45] : memref<1x1x32xf32, #tpu.memory_space<vmem>>, vector<1x1x32xf32>
    %91 = vector.shape_cast %90 : vector<1x1x32xf32> to vector<1x32xf32>
    %92 = vector.broadcast %91 : vector<1x32xf32> to vector<8x32xf32>
    %93 = arith.addf %89, %92 : vector<8x32xf32>
    %94 = arith.addf %93, %75 : vector<8x32xf32>
    %c0_46 = arith.constant 0 : index
    %c0_47 = arith.constant 0 : index
    %c0_48 = arith.constant 0 : index
    %95 = vector.load %arg13[%c0_46, %c0_47, %c0_48] : memref<1x1x32xf32, #tpu.memory_space<vmem>>, vector<1x1x32xf32>
    %96 = vector.shape_cast %95 : vector<1x1x32xf32> to vector<1x32xf32>
    %c0_49 = arith.constant 0 : index
    %c0_50 = arith.constant 0 : index
    %c0_51 = arith.constant 0 : index
    %97 = vector.load %arg14[%c0_49, %c0_50, %c0_51] : memref<1x1x32xf32, #tpu.memory_space<vmem>>, vector<1x1x32xf32>
    %98 = vector.shape_cast %97 : vector<1x1x32xf32> to vector<1x32xf32>
    %cst_52 = arith.constant dense<0.000000e+00> : vector<8xf32>
    %99 = vector.multi_reduction <add>, %94, %cst_52 [1] : vector<8x32xf32> to vector<8xf32>
    %100 = vector.shape_cast %99 : vector<8xf32> to vector<8x1xf32>
    %cst_53 = arith.constant 3.200000e+01 : f32
    %101 = vector.broadcast %cst_53 : f32 to vector<8x1xf32>
    %102 = arith.divf %100, %101 : vector<8x1xf32>
    %103 = vector.broadcast %102 : vector<8x1xf32> to vector<8x32xf32>
    %104 = arith.subf %94, %103 : vector<8x32xf32>
    %105 = arith.mulf %104, %104 : vector<8x32xf32>
    %cst_54 = arith.constant dense<0.000000e+00> : vector<8xf32>
    %106 = vector.multi_reduction <add>, %105, %cst_54 [1] : vector<8x32xf32> to vector<8xf32>
    %107 = vector.shape_cast %106 : vector<8xf32> to vector<8x1xf32>
    %cst_55 = arith.constant 3.200000e+01 : f32
    %108 = vector.broadcast %cst_55 : f32 to vector<8x1xf32>
    %109 = arith.divf %107, %108 : vector<8x1xf32>
    %110 = vector.broadcast %102 : vector<8x1xf32> to vector<8x32xf32>
    %111 = arith.subf %94, %110 : vector<8x32xf32>
    %cst_56 = arith.constant 9.99999974E-6 : f32
    %112 = vector.broadcast %cst_56 : f32 to vector<8x1xf32>
    %113 = arith.addf %109, %112 : vector<8x1xf32>
    %114 = math.rsqrt %113 : vector<8x1xf32>
    %115 = vector.broadcast %114 : vector<8x1xf32> to vector<8x32xf32>
    %116 = arith.mulf %111, %115 : vector<8x32xf32>
    %117 = vector.broadcast %96 : vector<1x32xf32> to vector<8x32xf32>
    %118 = arith.mulf %116, %117 : vector<8x32xf32>
    %119 = vector.broadcast %98 : vector<1x32xf32> to vector<8x32xf32>
    %120 = arith.addf %118, %119 : vector<8x32xf32>
    %c0_57 = arith.constant 0 : index
    %c0_58 = arith.constant 0 : index
    %c0_59 = arith.constant 0 : index
    %121 = vector.load %arg15[%c0_57, %c0_58, %c0_59] : memref<1x8x32xf32, #tpu.memory_space<vmem>>, vector<1x8x32xf32>
    %122 = vector.shape_cast %121 : vector<1x8x32xf32> to vector<8x32xf32>
    %123 = vector.shape_cast %120 : vector<8x32xf32> to vector<1x8x32xf32>
    tpu.vector_store %arg15[%c0_57, %c0_58, %c0_59], %123 {strides = array<i32>} : memref<1x8x32xf32, #tpu.memory_space<vmem>>, vector<1x8x32xf32>,
    return
  }
  func.func @transform_0(%arg0: i32, %arg1: i32) -> (i32, i32, i32) {
    %c0_i32 = arith.constant 0 : i32
    %c0_i32_0 = arith.constant 0 : i32
    %c0_i32_1 = arith.constant 0 : i32
    return %arg0, %c0_i32, %c0_i32_0 : i32, i32, i32
  }
  func.func @transform_1(%arg0: i32, %arg1: i32) -> (i32, i32, i32) {
    %c0_i32 = arith.constant 0 : i32
    %c0_i32_0 = arith.constant 0 : i32
    %c0_i32_1 = arith.constant 0 : i32
    %c0_i32_2 = arith.constant 0 : i32
    return %c0_i32, %c0_i32_0, %c0_i32_1 : i32, i32, i32
  }
  func.func @transform_2(%arg0: i32, %arg1: i32) -> (i32, i32, i32) {
    %c0_i32 = arith.constant 0 : i32
    %c0_i32_0 = arith.constant 0 : i32
    %c0_i32_1 = arith.constant 0 : i32
    return %arg1, %c0_i32, %c0_i32_0 : i32, i32, i32
  }
  func.func @transform_3(%arg0: i32, %arg1: i32) -> (i32, i32, i32) {
    %c0_i32 = arith.constant 0 : i32
    %c0_i32_0 = arith.constant 0 : i32
    %c0_i32_1 = arith.constant 0 : i32
    return %arg1, %c0_i32, %c0_i32_0 : i32, i32, i32
  }
  func.func @transform_4(%arg0: i32, %arg1: i32) -> (i32, i32, i32) {
    %c0_i32 = arith.constant 0 : i32
    %c0_i32_0 = arith.constant 0 : i32
    %c0_i32_1 = arith.constant 0 : i32
    return %arg1, %c0_i32, %c0_i32_0 : i32, i32, i32
  }
  func.func @transform_5(%arg0: i32, %arg1: i32) -> (i32, i32, i32) {
    %c0_i32 = arith.constant 0 : i32
    %c0_i32_0 = arith.constant 0 : i32
    %c0_i32_1 = arith.constant 0 : i32
    return %arg1, %c0_i32, %c0_i32_0 : i32, i32, i32
  }
  func.func @transform_6(%arg0: i32, %arg1: i32) -> (i32, i32, i32) {
    %c0_i32 = arith.constant 0 : i32
    %c0_i32_0 = arith.constant 0 : i32
    %c0_i32_1 = arith.constant 0 : i32
    return %arg1, %c0_i32, %c0_i32_0 : i32, i32, i32
  }
  func.func @transform_7(%arg0: i32, %arg1: i32) -> (i32, i32, i32) {
    %c0_i32 = arith.constant 0 : i32
    %c0_i32_0 = arith.constant 0 : i32
    %c0_i32_1 = arith.constant 0 : i32
    return %arg1, %c0_i32, %c0_i32_0 : i32, i32, i32
  }
  func.func @transform_8(%arg0: i32, %arg1: i32) -> (i32, i32, i32) {
    %c0_i32 = arith.constant 0 : i32
    %c0_i32_0 = arith.constant 0 : i32
    %c0_i32_1 = arith.constant 0 : i32
    return %arg1, %c0_i32, %c0_i32_0 : i32, i32, i32
  }
  func.func @transform_9(%arg0: i32, %arg1: i32) -> (i32, i32, i32) {
    %c0_i32 = arith.constant 0 : i32
    %c0_i32_0 = arith.constant 0 : i32
    %c0_i32_1 = arith.constant 0 : i32
    return %arg1, %c0_i32, %c0_i32_0 : i32, i32, i32
  }
  func.func @transform_10(%arg0: i32, %arg1: i32) -> (i32, i32, i32) {
    %c0_i32 = arith.constant 0 : i32
    %c0_i32_0 = arith.constant 0 : i32
    %c0_i32_1 = arith.constant 0 : i32
    return %arg1, %c0_i32, %c0_i32_0 : i32, i32, i32
  }
  func.func @transform_11(%arg0: i32, %arg1: i32) -> (i32, i32, i32) {
    %c0_i32 = arith.constant 0 : i32
    %c0_i32_0 = arith.constant 0 : i32
    %c0_i32_1 = arith.constant 0 : i32
    return %arg1, %c0_i32, %c0_i32_0 : i32, i32, i32
  }
  func.func @transform_12(%arg0: i32, %arg1: i32) -> (i32, i32, i32) {
    %c0_i32 = arith.constant 0 : i32
    %c0_i32_0 = arith.constant 0 : i32
    %c0_i32_1 = arith.constant 0 : i32
    return %arg1, %c0_i32, %c0_i32_0 : i32, i32, i32
  }
  func.func @transform_13(%arg0: i32, %arg1: i32) -> (i32, i32, i32) {
    %c0_i32 = arith.constant 0 : i32
    %c0_i32_0 = arith.constant 0 : i32
    %c0_i32_1 = arith.constant 0 : i32
    return %arg0, %c0_i32, %c0_i32_0 : i32, i32, i32
  }
}

</mosaic_0001>

<llo_original>
// kernel: tpu_custom_call.1
$region0: #{tpu_custom_call.1}
  #allocation0 [shape = 'u32[]', space=smem, size = 0x4, offset = 0x4, fixed_abs, tag = 'smem constant byte address 0x4 - core index']
  #allocation1 [shape = 'u32[144,128]{1,0:T(1,128)}', space=vmem, size = 0x12000, scoped, tag = 'internal scratch']
  %s0 = inlined_call_operand.hbm [shape: f32[2,8,32], index: 0, kind: input, shape index: {}]
  %s1 = inlined_call_operand.vmem [shape: bf16[4,1,32], index: 1, kind: input, shape index: {}]
  %s2 = inlined_call_operand.vmem [shape: bf16[2,32,384], index: 2, kind: input, shape index: {}]
  %s3 = inlined_call_operand.hbm [shape: bf16[2,32,32], index: 3, kind: input, shape index: {}]
  %s4 = inlined_call_operand.vmem [shape: f32[2,1,32], index: 4, kind: input, shape index: {}]
  %s5 = inlined_call_operand.vmem [shape: f32[2,1,32], index: 5, kind: input, shape index: {}]
  %s6 = inlined_call_operand.vmem [shape: f32[2,1,32], index: 6, kind: input, shape index: {}]
  %s7 = inlined_call_operand.hbm [shape: bf16[2,32,64], index: 7, kind: input, shape index: {}]
  %s8 = inlined_call_operand.vmem [shape: f32[2,1,64], index: 8, kind: input, shape index: {}]
  %s9 = inlined_call_operand.vmem [shape: bf16[2,64,32], index: 9, kind: input, shape index: {}]
  %s10 = inlined_call_operand.vmem [shape: f32[2,1,32], index: 10, kind: input, shape index: {}]
  %s11 = inlined_call_operand.vmem [shape: f32[2,1,32], index: 11, kind: input, shape index: {}]
  %s12 = inlined_call_operand.vmem [shape: f32[2,1,32], index: 12, kind: input, shape index: {}]
  %s13 = inlined_call_operand.hbm [shape: f32[2,8,32], index: 13, kind: output, shape index: {}]
  %s14 = sld [smem:[#allocation0]]
  $region101: #{tpu_custom_call.1} parent=0
    _
  %s16 = ssub.s32 1, %s14
  %s17 = scalar_select 0, %s16, %s14
  $region1: #{tpu_custom_call.1} parent=0
    #allocation2 [shape = 'u8[8192]{0}', space=vmem, size = 0x2000, scoped, tag = 'input window, operand 0']
    #allocation3 [shape = 's32[2]{0}', space=sflag, size = 0x8, scoped, tag = 'scoped memory for tpu_custom_call.1']
    #allocation4 [shape = 's32[2]{0}', space=sflag, size = 0x8, scoped, tag = 'scoped memory for tpu_custom_call.1']
    #allocation5 [shape = 'u8[16384]{0}', space=vmem, size = 0x4000, scoped, tag = 'input window, operand 3']
    #allocation6 [shape = 's32[2]{0}', space=sflag, size = 0x8, scoped, tag = 'scoped memory for tpu_custom_call.1']
    #allocation7 [shape = 'u8[16384]{0}', space=vmem, size = 0x4000, scoped, tag = 'input window, operand 7']
    #allocation8 [shape = 'u8[8192]{0}', space=vmem, size = 0x2000, scoped, tag = 'output window, operand 0']
    %18 = vsyncpa [#allocation3], 0
    %s19 = scalar_lea.sflag [#allocation3], 1
    %20 = vsyncpa %s19, 0
    %21 = vsyncpa [#allocation6], 0
    %s22 = scalar_lea.sflag [#allocation6], 1
    %23 = vsyncpa %s22, 0
    %24 = vsyncpa [#allocation4], 0
    %s25 = scalar_lea.sflag [#allocation4], 1
    %26 = vsyncpa %s25, 0
    loop: start=0, step=1, limit=6
    $region2: #{tpu_custom_call.1} parent=1 // loop_pre_header
      _
    $region3: #{tpu_custom_call.1} parent=1 // loop_header
      %s28 = sphi 0, %s32
      %p29 = scmp.ge.s32.totalorder %s28, 6
      %s35 = sphi 0, %s47
      %s36 = sphi 0, %s43
      %s37 = sphi 0, %s35
      %s38 = sphi 0, %s36
      %s39 = sphi 0, %s37
      %s40 = sphi 0, %s38
      %s50 = sphi 0, %s52
      %s53 = sphi 0, %s50
      %s54 = sphi 0, %s53
      %s70 = sphi 0, %s54
      %s74 = sphi 0, %s74
      %s76 = sphi 0, %s74
      %s77 = sphi 0, %s76
      %s91 = sphi 0, %s77
      %s97 = sphi 0, %s99
      %s100 = sphi 0, %s97
      %s101 = sphi 0, %s100
      %s117 = sphi 0, %s101
      %s123 = sphi 0, %s125
      %s126 = sphi 0, %s123
      %s127 = sphi 0, %s126
      %s143 = sphi 0, %s127
      %s149 = sphi 0, %s151
      %s152 = sphi 0, %s149
      %s153 = sphi 0, %s152
      %s169 = sphi 0, %s153
      %s175 = sphi 0, %s177
      %s178 = sphi 0, %s175
      %s179 = sphi 0, %s178
      %s195 = sphi 0, %s179
      %s201 = sphi 0, %s203
      %s204 = sphi 0, %s201
      %s205 = sphi 0, %s204
      %s221 = sphi 0, %s205
      %s227 = sphi 0, %s229
      %s230 = sphi 0, %s227
      %s231 = sphi 0, %s230
      %s247 = sphi 0, %s231
      %s253 = sphi 0, %s255
      %s256 = sphi 0, %s253
      %s257 = sphi 0, %s256
      %s273 = sphi 0, %s257
      %s279 = sphi 0, %s281
      %s282 = sphi 0, %s279
      %s283 = sphi 0, %s282
      %s299 = sphi 0, %s283
      %s305 = sphi 0, %s307
      %s308 = sphi 0, %s305
      %s309 = sphi 0, %s308
      %s325 = sphi 0, %s309
      %s331 = sphi 0, %s333
      %s334 = sphi 0, %s331
      %s335 = sphi 0, %s334
      %s351 = sphi 0, %s335
      %s357 = sphi 0, %s359
      %s360 = sphi 0, %s357
      %s361 = sphi 0, %s360
      %s377 = sphi 0, %s361
      %s383 = sphi 0, %s385
      %s386 = sphi 0, %s383
      %s387 = sphi 0, %s386
      %s403 = sphi 0, %s387
    $region4: #{tpu_custom_call.1} parent=1 // loop_header_branch
      %31 = sbr.rel (%p29) target = $region8
    $region5: #{tpu_custom_call.1} parent=1 // loop_body
      %s33 = ssub.s32 %s28, 1
      %s34 = ssub.s32 %s28, 2
      %s41 = sadd.s32 1, %s36
      %p42 = scmp.ge.s32.totalorder %s41, 2
      %s43 = scalar_select %p42, 0, %s41
      %s44 = sadd.s32 1, %s35
      %s45 = scalar_select %p42, %s44, %s35
      %p46 = scmp.ge.s32.totalorder %s45, 2
      %s47 = scalar_select %p46, 0, %s45
      %s48 = ssub.s32 %s35, %s47
      %p49 = scmp.eq.s32.totalorder %s48, 0
      %s51 = sadd.s32 %s50, 1
      %s52 = scalar_select %p49, %s50, %s51
      %p55 = pneg %p49
      %p56 = scmp.eq.s32.totalorder %s28, 3
      %p57 = por %p55, %p56
      %p58 = scmp.ne.s32.totalorder %s50, %s53
      %p59 = scmp.eq.s32.totalorder %s28, 0
      %p60 = por %p58, %p59
      %p61 = scmp.ne.s32.totalorder %s50, %s53
      %p62 = scmp.eq.s32.totalorder %s33, 3
      %p63 = por %p61, %p62
      %p64 = scmp.ne.s32.totalorder %s53, %s54
      %p65 = scmp.eq.s32.totalorder %s33, 0
      %p66 = por %p64, %p65
      %p67 = scmp.ne.s32.totalorder %s53, %s54
      %p68 = scmp.eq.s32.totalorder %s34, 3
      %p69 = por %p67, %p68
      %p71 = scmp.ne.s32.totalorder %s54, %s70
      %p72 = scmp.eq.s32.totalorder %s34, 0
      %p73 = por %p71, %p72
      %s75 = sadd.s32 %s74, 1
      %p78 = scmp.eq.s32.totalorder %s28, 3
      %p79 = scmp.ne.s32.totalorder %s74, %s76
      %p80 = scmp.eq.s32.totalorder %s28, 0
      %p81 = por %p79, %p80
      %p82 = scmp.ne.s32.totalorder %s74, %s76
      %p83 = scmp.eq.s32.totalorder %s33, 3
      %p84 = por %p82, %p83
      %p85 = scmp.ne.s32.totalorder %s76, %s77
      %p86 = scmp.eq.s32.totalorder %s33, 0
      %p87 = por %p85, %p86
      %p88 = scmp.ne.s32.totalorder %s76, %s77
      %p89 = scmp.eq.s32.totalorder %s34, 3
      %p90 = por %p88, %p89
      %p92 = scmp.ne.s32.totalorder %s77, %s91
      %p93 = scmp.eq.s32.totalorder %s34, 0
      %p94 = por %p92, %p93
      %s95 = ssub.s32 %s36, %s43
      %p96 = scmp.eq.s32.totalorder %s95, 0
      %s98 = sadd.s32 %s97, 1
      %s99 = scalar_select %p96, %s97, %s98
      %p102 = pneg %p96
      %p103 = scmp.eq.s32.totalorder %s28, 3
      %p104 = por %p102, %p103
      %p105 = scmp.ne.s32.totalorder %s97, %s100
      %p106 = scmp.eq.s32.totalorder %s28, 0
      %p107 = por %p105, %p106
      %p108 = scmp.ne.s32.totalorder %s97, %s100
      %p109 = scmp.eq.s32.totalorder %s33, 3
      %p110 = por %p108, %p109
      %p111 = scmp.ne.s32.totalorder %s100, %s101
      %p112 = scmp.eq.s32.totalorder %s33, 0
      %p113 = por %p111, %p112
      %p114 = scmp.ne.s32.totalorder %s100, %s101
      %p115 = scmp.eq.s32.totalorder %s34, 3
      %p116 = por %p114, %p115
      %p118 = scmp.ne.s32.totalorder %s101, %s117
      %p119 = scmp.eq.s32.totalorder %s34, 0
      %p120 = por %p118, %p119
      %s121 = ssub.s32 %s36, %s43
      %p122 = scmp.eq.s32.totalorder %s121, 0
      %s124 = sadd.s32 %s123, 1
      %s125 = scalar_select %p122, %s123, %s124
      %p128 = pneg %p122
      %p129 = scmp.eq.s32.totalorder %s28, 3
      %p130 = por %p128, %p129
      %p131 = scmp.ne.s32.totalorder %s123, %s126
      %p132 = scmp.eq.s32.totalorder %s28, 0
      %p133 = por %p131, %p132
      %p134 = scmp.ne.s32.totalorder %s123, %s126
      %p135 = scmp.eq.s32.totalorder %s33, 3
      %p136 = por %p134, %p135
      %p137 = scmp.ne.s32.totalorder %s126, %s127
      %p138 = scmp.eq.s32.totalorder %s33, 0
      %p139 = por %p137, %p138
      %p140 = scmp.ne.s32.totalorder %s126, %s127
      %p141 = scmp.eq.s32.totalorder %s34, 3
      %p142 = por %p140, %p141
      %p144 = scmp.ne.s32.totalorder %s127, %s143
      %p145 = scmp.eq.s32.totalorder %s34, 0
      %p146 = por %p144, %p145
      %s147 = ssub.s32 %s36, %s43
      %p148 = scmp.eq.s32.totalorder %s147, 0
      %s150 = sadd.s32 %s149, 1
      %s151 = scalar_select %p148, %s149, %s150
      %p154 = pneg %p148
      %p155 = scmp.eq.s32.totalorder %s28, 3
      %p156 = por %p154, %p155
      %p157 = scmp.ne.s32.totalorder %s149, %s152
      %p158 = scmp.eq.s32.totalorder %s28, 0
      %p159 = por %p157, %p158
      %p160 = scmp.ne.s32.totalorder %s149, %s152
      %p161 = scmp.eq.s32.totalorder %s33, 3
      %p162 = por %p160, %p161
      %p163 = scmp.ne.s32.totalorder %s152, %s153
      %p164 = scmp.eq.s32.totalorder %s33, 0
      %p165 = por %p163, %p164
      %p166 = scmp.ne.s32.totalorder %s152, %s153
      %p167 = scmp.eq.s32.totalorder %s34, 3
      %p168 = por %p166, %p167
      %p170 = scmp.ne.s32.totalorder %s153, %s169
      %p171 = scmp.eq.s32.totalorder %s34, 0
      %p172 = por %p170, %p171
      %s173 = ssub.s32 %s36, %s43
      %p174 = scmp.eq.s32.totalorder %s173, 0
      %s176 = sadd.s32 %s175, 1
      %s177 = scalar_select %p174, %s175, %s176
      %p180 = pneg %p174
      %p181 = scmp.eq.s32.totalorder %s28, 3
      %p182 = por %p180, %p181
      %p183 = scmp.ne.s32.totalorder %s175, %s178
      %p184 = scmp.eq.s32.totalorder %s28, 0
      %p185 = por %p183, %p184
      %p186 = scmp.ne.s32.totalorder %s175, %s178
      %p187 = scmp.eq.s32.totalorder %s33, 3
      %p188 = por %p186, %p187
      %p189 = scmp.ne.s32.totalorder %s178, %s179
      %p190 = scmp.eq.s32.totalorder %s33, 0
      %p191 = por %p189, %p190
      %p192 = scmp.ne.s32.totalorder %s178, %s179
      %p193 = scmp.eq.s32.totalorder %s34, 3
      %p194 = por %p192, %p193
      %p196 = scmp.ne.s32.totalorder %s179, %s195
      %p197 = scmp.eq.s32.totalorder %s34, 0
      %p198 = por %p196, %p197
      %s199 = ssub.s32 %s36, %s43
      %p200 = scmp.eq.s32.totalorder %s199, 0
      %s202 = sadd.s32 %s201, 1
      %s203 = scalar_select %p200, %s201, %s202
      %p206 = pneg %p200
      %p207 = scmp.eq.s32.totalorder %s28, 3
      %p208 = por %p206, %p207
      %p209 = scmp.ne.s32.totalorder %s201, %s204
      %p210 = scmp.eq.s32.totalorder %s28, 0
      %p211 = por %p209, %p210
      %p212 = scmp.ne.s32.totalorder %s201, %s204
      %p213 = scmp.eq.s32.totalorder %s33, 3
      %p214 = por %p212, %p213
      %p215 = scmp.ne.s32.totalorder %s204, %s205
      %p216 = scmp.eq.s32.totalorder %s33, 0
      %p217 = por %p215, %p216
      %p218 = scmp.ne.s32.totalorder %s204, %s205
      %p219 = scmp.eq.s32.totalorder %s34, 3
      %p220 = por %p218, %p219
      %p222 = scmp.ne.s32.totalorder %s205, %s221
      %p223 = scmp.eq.s32.totalorder %s34, 0
      %p224 = por %p222, %p223
      %s225 = ssub.s32 %s36, %s43
      %p226 = scmp.eq.s32.totalorder %s225, 0
      %s228 = sadd.s32 %s227, 1
      %s229 = scalar_select %p226, %s227, %s228
      %p232 = pneg %p226
      %p233 = scmp.eq.s32.totalorder %s28, 3
      %p234 = por %p232, %p233
      %p235 = scmp.ne.s32.totalorder %s227, %s230
      %p236 = scmp.eq.s32.totalorder %s28, 0
      %p237 = por %p235, %p236
      %p238 = scmp.ne.s32.totalorder %s227, %s230
      %p239 = scmp.eq.s32.totalorder %s33, 3
      %p240 = por %p238, %p239
      %p241 = scmp.ne.s32.totalorder %s230, %s231
      %p242 = scmp.eq.s32.totalorder %s33, 0
      %p243 = por %p241, %p242
      %p244 = scmp.ne.s32.totalorder %s230, %s231
      %p245 = scmp.eq.s32.totalorder %s34, 3
      %p246 = por %p244, %p245
      %p248 = scmp.ne.s32.totalorder %s231, %s247
      %p249 = scmp.eq.s32.totalorder %s34, 0
      %p250 = por %p248, %p249
      %s251 = ssub.s32 %s36, %s43
      %p252 = scmp.eq.s32.totalorder %s251, 0
      %s254 = sadd.s32 %s253, 1
      %s255 = scalar_select %p252, %s253, %s254
      %p258 = pneg %p252
      %p259 = scmp.eq.s32.totalorder %s28, 3
      %p260 = por %p258, %p259
      %p261 = scmp.ne.s32.totalorder %s253, %s256
      %p262 = scmp.eq.s32.totalorder %s28, 0
      %p263 = por %p261, %p262
      %p264 = scmp.ne.s32.totalorder %s253, %s256
      %p265 = scmp.eq.s32.totalorder %s33, 3
      %p266 = por %p264, %p265
      %p267 = scmp.ne.s32.totalorder %s256, %s257
      %p268 = scmp.eq.s32.totalorder %s33, 0
      %p269 = por %p267, %p268
      %p270 = scmp.ne.s32.totalorder %s256, %s257
      %p271 = scmp.eq.s32.totalorder %s34, 3
      %p272 = por %p270, %p271
      %p274 = scmp.ne.s32.totalorder %s257, %s273
      %p275 = scmp.eq.s32.totalorder %s34, 0
      %p276 = por %p274, %p275
      %s277 = ssub.s32 %s36, %s43
      %p278 = scmp.eq.s32.totalorder %s277, 0
      %s280 = sadd.s32 %s279, 1
      %s281 = scalar_select %p278, %s279, %s280
      %p284 = pneg %p278
      %p285 = scmp.eq.s32.totalorder %s28, 3
      %p286 = por %p284, %p285
      %p287 = scmp.ne.s32.totalorder %s279, %s282
      %p288 = scmp.eq.s32.totalorder %s28, 0
      %p289 = por %p287, %p288
      %p290 = scmp.ne.s32.totalorder %s279, %s282
      %p291 = scmp.eq.s32.totalorder %s33, 3
      %p292 = por %p290, %p291
      %p293 = scmp.ne.s32.totalorder %s282, %s283
      %p294 = scmp.eq.s32.totalorder %s33, 0
      %p295 = por %p293, %p294
      %p296 = scmp.ne.s32.totalorder %s282, %s283
      %p297 = scmp.eq.s32.totalorder %s34, 3
      %p298 = por %p296, %p297
      %p300 = scmp.ne.s32.totalorder %s283, %s299
      %p301 = scmp.eq.s32.totalorder %s34, 0
      %p302 = por %p300, %p301
      %s303 = ssub.s32 %s36, %s43
      %p304 = scmp.eq.s32.totalorder %s303, 0
      %s306 = sadd.s32 %s305, 1
      %s307 = scalar_select %p304, %s305, %s306
      %p310 = pneg %p304
      %p311 = scmp.eq.s32.totalorder %s28, 3
      %p312 = por %p310, %p311
      %p313 = scmp.ne.s32.totalorder %s305, %s308
      %p314 = scmp.eq.s32.totalorder %s28, 0
      %p315 = por %p313, %p314
      %p316 = scmp.ne.s32.totalorder %s305, %s308
      %p317 = scmp.eq.s32.totalorder %s33, 3
      %p318 = por %p316, %p317
      %p319 = scmp.ne.s32.totalorder %s308, %s309
      %p320 = scmp.eq.s32.totalorder %s33, 0
      %p321 = por %p319, %p320
      %p322 = scmp.ne.s32.totalorder %s308, %s309
      %p323 = scmp.eq.s32.totalorder %s34, 3
      %p324 = por %p322, %p323
      %p326 = scmp.ne.s32.totalorder %s309, %s325
      %p327 = scmp.eq.s32.totalorder %s34, 0
      %p328 = por %p326, %p327
      %s329 = ssub.s32 %s36, %s43
      %p330 = scmp.eq.s32.totalorder %s329, 0
      %s332 = sadd.s32 %s331, 1
      %s333 = scalar_select %p330, %s331, %s332
      %p336 = pneg %p330
      %p337 = scmp.eq.s32.totalorder %s28, 3
      %p338 = por %p336, %p337
      %p339 = scmp.ne.s32.totalorder %s331, %s334
      %p340 = scmp.eq.s32.totalorder %s28, 0
      %p341 = por %p339, %p340
      %p342 = scmp.ne.s32.totalorder %s331, %s334
      %p343 = scmp.eq.s32.totalorder %s33, 3
      %p344 = por %p342, %p343
      %p345 = scmp.ne.s32.totalorder %s334, %s335
      %p346 = scmp.eq.s32.totalorder %s33, 0
      %p347 = por %p345, %p346
      %p348 = scmp.ne.s32.totalorder %s334, %s335
      %p349 = scmp.eq.s32.totalorder %s34, 3
      %p350 = por %p348, %p349
      %p352 = scmp.ne.s32.totalorder %s335, %s351
      %p353 = scmp.eq.s32.totalorder %s34, 0
      %p354 = por %p352, %p353
      %s355 = ssub.s32 %s36, %s43
      %p356 = scmp.eq.s32.totalorder %s355, 0
      %s358 = sadd.s32 %s357, 1
      %s359 = scalar_select %p356, %s357, %s358
      %p362 = pneg %p356
      %p363 = scmp.eq.s32.totalorder %s28, 3
      %p364 = por %p362, %p363
      %p365 = scmp.ne.s32.totalorder %s357, %s360
      %p366 = scmp.eq.s32.totalorder %s28, 0
      %p367 = por %p365, %p366
      %p368 = scmp.ne.s32.totalorder %s357, %s360
      %p369 = scmp.eq.s32.totalorder %s33, 3
      %p370 = por %p368, %p369
      %p371 = scmp.ne.s32.totalorder %s360, %s361
      %p372 = scmp.eq.s32.totalorder %s33, 0
      %p373 = por %p371, %p372
      %p374 = scmp.ne.s32.totalorder %s360, %s361
      %p375 = scmp.eq.s32.totalorder %s34, 3
      %p376 = por %p374, %p375
      %p378 = scmp.ne.s32.totalorder %s361, %s377
      %p379 = scmp.eq.s32.totalorder %s34, 0
      %p380 = por %p378, %p379
      %s381 = ssub.s32 %s35, %s47
      %p382 = scmp.eq.s32.totalorder %s381, 0
      %s384 = sadd.s32 %s383, 1
      %s385 = scalar_select %p382, %s383, %s384
      %p388 = pneg %p382
      %p389 = scmp.eq.s32.totalorder %s28, 3
      %p390 = por %p388, %p389
      %p391 = scmp.ne.s32.totalorder %s383, %s386
      %p392 = scmp.eq.s32.totalorder %s28, 0
      %p393 = por %p391, %p392
      %p394 = scmp.ne.s32.totalorder %s383, %s386
      %p395 = scmp.eq.s32.totalorder %s33, 3
      %p396 = por %p394, %p395
      %p397 = scmp.ne.s32.totalorder %s386, %s387
      %p398 = scmp.eq.s32.totalorder %s33, 0
      %p399 = por %p397, %p398
      %p400 = scmp.ne.s32.totalorder %s386, %s387
      %p401 = scmp.eq.s32.totalorder %s34, 3
      %p402 = por %p400, %p401
      %p404 = scmp.ne.s32.totalorder %s387, %s403
      %p405 = scmp.eq.s32.totalorder %s34, 0
      %p406 = por %p404, %p405
      %p407 = scmp.le.s32.totalorder 1, %s28
      %p408 = scmp.lt.s32.totalorder %s28, 5
      %p409 = pnand %p407, %p408
      %p410 = pneg %p409
      // Predicated region
      $region9: #{tpu_custom_call.1} parent=5 // pred_check
        _
      $region10: #{tpu_custom_call.1} parent=5 // pred_check_branch
        %412 = sbr.rel (%p409) target = $region12
      $region11: #{tpu_custom_call.1} parent=5 // pred_region
        %s413 = ssub.s32 %s28, 1
        // Predicated region
        $region13: #{tpu_custom_call.1} parent=11 // pred_check
          %p414 = pneg %p87
        $region14: #{tpu_custom_call.1} parent=11 // pred_check_branch
          %416 = sbr.rel (%p414) target = $region16
        $region15: #{tpu_custom_call.1} parent=11 // pred_region
          _
        $region16: #{tpu_custom_call.1} parent=11 // pred_fallthru
          _
      $region12: #{tpu_custom_call.1} parent=5 // pred_fallthru
        _
      %p417 = scmp.lt.s32.totalorder %s28, 4
      // Predicated region
      $region17: #{tpu_custom_call.1} parent=5 // pred_check
        %p418 = pneg %p417
      $region18: #{tpu_custom_call.1} parent=5 // pred_check_branch
        %420 = sbr.rel (%p418) target = $region20
      $region19: #{tpu_custom_call.1} parent=5 // pred_region
        // Predicated region
        $region21: #{tpu_custom_call.1} parent=19 // pred_check
          %p421 = pneg %p60
        $region22: #{tpu_custom_call.1} parent=19 // pred_check_branch
          %423 = sbr.rel (%p421) target = $region24
        $region23: #{tpu_custom_call.1} parent=19 // pred_region
          %s424 = sand.u32 %s50, 1
          %s425 = scalar_lea.sflag [#allocation3], %s424
          %s426 = sand.u32 %s50, 1
          %s427 = smul.addr %s426, 8
          %s428 = scalar_lea.vmem [#allocation2], %s427
          %s430 = ssub.s32 128, 128
          %431 = vsyncadd %s425, %s430
          %s432 = smul.addr %s35, 128
          %s433 = scalar_lea.hbm %s0, %s432
          %s435 = sshll.u32 %s428, 4
          %s436 = int_to_ptr.vmem [resolvable:$true] %s435
          %438 = dma.hbm_to_vmem [thread:$0]  %s433, 128, %s436, %s425
        $region24: #{tpu_custom_call.1} parent=19 // pred_fallthru
          _
        // Predicated region
        $region25: #{tpu_custom_call.1} parent=19 // pred_check
          %p439 = pneg %p107
        $region26: #{tpu_custom_call.1} parent=19 // pred_check_branch
          %441 = sbr.rel (%p439) target = $region28
        $region27: #{tpu_custom_call.1} parent=19 // pred_region
          %p442 = scmp.lt.s32.totalorder %s36, 1
          %s443 = scalar_select %p442, %s36, 1
          %s444 = smul.addr %s443, 12
          %s445 = smul.addr %s444, 4
          %s446 = scalar_lea.vmem %s2, %s445
        $region28: #{tpu_custom_call.1} parent=19 // pred_fallthru
          _
        // Predicated region
        $region29: #{tpu_custom_call.1} parent=19 // pred_check
          %p447 = pneg %p133
        $region30: #{tpu_custom_call.1} parent=19 // pred_check_branch
          %449 = sbr.rel (%p447) target = $region32
        $region31: #{tpu_custom_call.1} parent=19 // pred_region
          %s450 = sand.u32 %s28, 1
          %s451 = scalar_lea.sflag [#allocation6], %s450
          %s452 = sand.u32 %s123, 1
          %s453 = smul.addr %s452, 16
          %s454 = scalar_lea.vmem [#allocation5], %s453
          %s456 = ssub.s32 256, 256
          %457 = vsyncadd %s451, %s456
          %s458 = smul.addr %s36, 4
          %s459 = smul.addr %s458, 64
          %s460 = scalar_lea.hbm %s3, %s459
          %s461 = sshll.u32 %s454, 4
          %s462 = int_to_ptr.vmem [resolvable:$true] %s461
          %467 = dma.hbm_to_vmem [thread:$0]  %s460, 256, %s462, %s451, 64, 64, 4
        $region32: #{tpu_custom_call.1} parent=19 // pred_fallthru
          _
        // Predicated region
        $region33: #{tpu_custom_call.1} parent=19 // pred_check
          %p468 = pneg %p159
        $region34: #{tpu_custom_call.1} parent=19 // pred_check_branch
          %470 = sbr.rel (%p468) target = $region36
        $region35: #{tpu_custom_call.1} parent=19 // pred_region
          %p471 = scmp.lt.s32.totalorder %s36, 1
          %s472 = scalar_select %p471, %s36, 1
          %s473 = scalar_lea.vmem %s4, %s472
        $region36: #{tpu_custom_call.1} parent=19 // pred_fallthru
          _
        // Predicated region
        $region37: #{tpu_custom_call.1} parent=19 // pred_check
          %p474 = pneg %p185
        $region38: #{tpu_custom_call.1} parent=19 // pred_check_branch
          %476 = sbr.rel (%p474) target = $region40
        $region39: #{tpu_custom_call.1} parent=19 // pred_region
          %p477 = scmp.lt.s32.totalorder %s36, 1
          %s478 = scalar_select %p477, %s36, 1
          %s479 = scalar_lea.vmem %s5, %s478
        $region40: #{tpu_custom_call.1} parent=19 // pred_fallthru
          _
        // Predicated region
        $region41: #{tpu_custom_call.1} parent=19 // pred_check
          %p480 = pneg %p211
        $region42: #{tpu_custom_call.1} parent=19 // pred_check_branch
          %482 = sbr.rel (%p480) target = $region44
        $region43: #{tpu_custom_call.1} parent=19 // pred_region
          %p483 = scmp.lt.s32.totalorder %s36, 1
          %s484 = scalar_select %p483, %s36, 1
          %s485 = scalar_lea.vmem %s6, %s484
        $region44: #{tpu_custom_call.1} parent=19 // pred_fallthru
          _
        // Predicated region
        $region45: #{tpu_custom_call.1} parent=19 // pred_check
          %p486 = pneg %p237
        $region46: #{tpu_custom_call.1} parent=19 // pred_check_branch
          %488 = sbr.rel (%p486) target = $region48
        $region47: #{tpu_custom_call.1} parent=19 // pred_region
          %s489 = sand.u32 %s28, 1
          %s490 = scalar_lea.sflag [#allocation6], %s489
          %s491 = sand.u32 %s227, 1
          %s492 = smul.addr %s491, 16
          %s493 = scalar_lea.vmem [#allocation7], %s492
          %s495 = ssub.s32 256, 256
          %496 = vsyncadd %s490, %s495
          %s497 = smul.addr %s36, 4
          %s498 = smul.addr %s497, 64
          %s499 = scalar_lea.hbm %s7, %s498
          %s500 = sshll.u32 %s493, 4
          %s501 = int_to_ptr.vmem [resolvable:$true] %s500
          %506 = dma.hbm_to_vmem [thread:$0]  %s499, 256, %s501, %s490, 64, 64, 4
        $region48: #{tpu_custom_call.1} parent=19 // pred_fallthru
          _
        // Predicated region
        $region49: #{tpu_custom_call.1} parent=19 // pred_check
          %p507 = pneg %p263
        $region50: #{tpu_custom_call.1} parent=19 // pred_check_branch
          %509 = sbr.rel (%p507) target = $region52
        $region51: #{tpu_custom_call.1} parent=19 // pred_region
          %p510 = scmp.lt.s32.totalorder %s36, 1
          %s511 = scalar_select %p510, %s36, 1
          %s512 = scalar_lea.vmem %s8, %s511
        $region52: #{tpu_custom_call.1} parent=19 // pred_fallthru
          _
        // Predicated region
        $region53: #{tpu_custom_call.1} parent=19 // pred_check
          %p513 = pneg %p289
        $region54: #{tpu_custom_call.1} parent=19 // pred_check_branch
          %515 = sbr.rel (%p513) target = $region56
        $region55: #{tpu_custom_call.1} parent=19 // pred_region
          %p516 = scmp.lt.s32.totalorder %s36, 1
          %s517 = scalar_select %p516, %s36, 1
          %s518 = smul.addr %s517, 8
          %s519 = smul.addr %s518, 4
          %s520 = scalar_lea.vmem %s9, %s519
        $region56: #{tpu_custom_call.1} parent=19 // pred_fallthru
          _
        // Predicated region
        $region57: #{tpu_custom_call.1} parent=19 // pred_check
          %p521 = pneg %p315
        $region58: #{tpu_custom_call.1} parent=19 // pred_check_branch
          %523 = sbr.rel (%p521) target = $region60
        $region59: #{tpu_custom_call.1} parent=19 // pred_region
          %p524 = scmp.lt.s32.totalorder %s36, 1
          %s525 = scalar_select %p524, %s36, 1
          %s526 = scalar_lea.vmem %s10, %s525
        $region60: #{tpu_custom_call.1} parent=19 // pred_fallthru
          _
        // Predicated region
        $region61: #{tpu_custom_call.1} parent=19 // pred_check
          %p527 = pneg %p341
        $region62: #{tpu_custom_call.1} parent=19 // pred_check_branch
          %529 = sbr.rel (%p527) target = $region64
        $region63: #{tpu_custom_call.1} parent=19 // pred_region
          %p530 = scmp.lt.s32.totalorder %s36, 1
          %s531 = scalar_select %p530, %s36, 1
          %s532 = scalar_lea.vmem %s11, %s531
        $region64: #{tpu_custom_call.1} parent=19 // pred_fallthru
          _
        // Predicated region
        $region65: #{tpu_custom_call.1} parent=19 // pred_check
          %p533 = pneg %p367
        $region66: #{tpu_custom_call.1} parent=19 // pred_check_branch
          %535 = sbr.rel (%p533) target = $region68
        $region67: #{tpu_custom_call.1} parent=19 // pred_region
          %p536 = scmp.lt.s32.totalorder %s36, 1
          %s537 = scalar_select %p536, %s36, 1
          %s538 = scalar_lea.vmem %s12, %s537
        $region68: #{tpu_custom_call.1} parent=19 // pred_fallthru
          _
      $region20: #{tpu_custom_call.1} parent=5 // pred_fallthru
        _
      %p539 = scmp.le.s32.totalorder 1, %s28
      %p540 = scmp.lt.s32.totalorder %s28, 5
      %p541 = pnand %p539, %p540
      %p542 = pneg %p541
      // Predicated region
      $region69: #{tpu_custom_call.1} parent=5 // pred_check
        _
      $region70: #{tpu_custom_call.1} parent=5 // pred_check_branch
        %544 = sbr.rel (%p541) target = $region72
      $region71: #{tpu_custom_call.1} parent=5 // pred_region
        %s545 = ssub.s32 %s28, 1
        %s546 = sand.u32 %s53, 1
        %s547 = scalar_lea.sflag [#allocation3], %s546
        %s548 = sand.u32 %s53, 1
        %s549 = smul.addr %s548, 8
        %s550 = scalar_lea.vmem [#allocation2], %s549
        // Predicated region
        $region73: #{tpu_custom_call.1} parent=71 // pred_check
          %p551 = pneg %p66
        $region74: #{tpu_custom_call.1} parent=71 // pred_check_branch
          %553 = sbr.rel (%p551) target = $region76
        $region75: #{tpu_custom_call.1} parent=71 // pred_region
          %554 = dma.done %s547, 128
        $region76: #{tpu_custom_call.1} parent=71 // pred_fallthru
          _
        %s555 = sand.u32 %s33, 1
        %s556 = scalar_lea.sflag [#allocation6], %s555
        %s557 = sand.u32 %s126, 1
        %s558 = smul.addr %s557, 16
        %s559 = scalar_lea.vmem [#allocation5], %s558
        // Predicated region
        $region77: #{tpu_custom_call.1} parent=71 // pred_check
          %p560 = pneg %p139
        $region78: #{tpu_custom_call.1} parent=71 // pred_check_branch
          %562 = sbr.rel (%p560) target = $region80
        $region79: #{tpu_custom_call.1} parent=71 // pred_region
          %563 = dma.done %s556, 256
        $region80: #{tpu_custom_call.1} parent=71 // pred_fallthru
          _
        %s564 = sand.u32 %s33, 1
        %s565 = scalar_lea.sflag [#allocation6], %s564
        %s566 = sand.u32 %s230, 1
        %s567 = smul.addr %s566, 16
        %s568 = scalar_lea.vmem [#allocation7], %s567
        // Predicated region
        $region81: #{tpu_custom_call.1} parent=71 // pred_check
          %p569 = pneg %p243
        $region82: #{tpu_custom_call.1} parent=71 // pred_check_branch
          %571 = sbr.rel (%p569) target = $region84
        $region83: #{tpu_custom_call.1} parent=71 // pred_region
          %572 = dma.done %s565, 256
        $region84: #{tpu_custom_call.1} parent=71 // pred_fallthru
          _
        %s573 = sand.u32 %s53, 1
        %s574 = scalar_lea.sflag [#allocation3], %s573
        %s575 = sand.u32 %s53, 1
        %s576 = smul.addr %s575, 8
        %s577 = scalar_lea.vmem [#allocation2], %s576
        %p578 = pneg %p66
        %p579 = pneg %p63
        %p580 = pneg %p87
        %p581 = pneg %p84
        %p582 = scmp.lt.s32.totalorder %s38, 1
        %s583 = scalar_select %p582, %s38, 1
        %s584 = smul.addr %s583, 12
        %s585 = smul.addr %s584, 4
        %s586 = scalar_lea.vmem %s2, %s585
        %p587 = pneg %p113
        %p588 = pneg %p110
        %s589 = sand.u32 %s33, 1
        %s590 = scalar_lea.sflag [#allocation6], %s589
        %s591 = sand.u32 %s126, 1
        %s592 = smul.addr %s591, 16
        %s593 = scalar_lea.vmem [#allocation5], %s592
        %p594 = pneg %p139
        %p595 = pneg %p136
        %p596 = scmp.lt.s32.totalorder %s38, 1
        %s597 = scalar_select %p596, %s38, 1
        %s598 = scalar_lea.vmem %s4, %s597
        %p599 = pneg %p165
        %p600 = pneg %p162
        %p601 = scmp.lt.s32.totalorder %s38, 1
        %s602 = scalar_select %p601, %s38, 1
        %s603 = scalar_lea.vmem %s5, %s602
        %p604 = pneg %p191
        %p605 = pneg %p188
        %p606 = scmp.lt.s32.totalorder %s38, 1
        %s607 = scalar_select %p606, %s38, 1
        %s608 = scalar_lea.vmem %s6, %s607
        %p609 = pneg %p217
        %p610 = pneg %p214
        %s611 = sand.u32 %s33, 1
        %s612 = scalar_lea.sflag [#allocation6], %s611
        %s613 = sand.u32 %s230, 1
        %s614 = smul.addr %s613, 16
        %s615 = scalar_lea.vmem [#allocation7], %s614
        %p616 = pneg %p243
        %p617 = pneg %p240
        %p618 = scmp.lt.s32.totalorder %s38, 1
        %s619 = scalar_select %p618, %s38, 1
        %s620 = scalar_lea.vmem %s8, %s619
        %p621 = pneg %p269
        %p622 = pneg %p266
        %p623 = scmp.lt.s32.totalorder %s38, 1
        %s624 = scalar_select %p623, %s38, 1
        %s625 = smul.addr %s624, 8
        %s626 = smul.addr %s625, 4
        %s627 = scalar_lea.vmem %s9, %s626
        %p628 = pneg %p295
        %p629 = pneg %p292
        %p630 = scmp.lt.s32.totalorder %s38, 1
        %s631 = scalar_select %p630, %s38, 1
        %s632 = scalar_lea.vmem %s10, %s631
        %p633 = pneg %p321
        %p634 = pneg %p318
        %p635 = scmp.lt.s32.totalorder %s38, 1
        %s636 = scalar_select %p635, %s38, 1
        %s637 = scalar_lea.vmem %s11, %s636
        %p638 = pneg %p347
        %p639 = pneg %p344
        %p640 = scmp.lt.s32.totalorder %s38, 1
        %s641 = scalar_select %p640, %s38, 1
        %s642 = scalar_lea.vmem %s12, %s641
        %p643 = pneg %p373
        %p644 = pneg %p370
        %p645 = pneg %p399
        %p646 = pneg %p396
        %s647 = sand.u32 %s386, 1
        %s648 = scalar_lea.sflag [#allocation4], %s647
        %s649 = sand.u32 %s386, 1
        %s650 = smul.addr %s649, 8
        %s651 = scalar_lea.vmem [#allocation8], %s650
        %p652 = scmp.lt.s32.totalorder %s38, 1
        %s653 = scalar_select %p652, %s38, 1
        %s654 = smul.addr %s653, 12
        %s655 = smul.addr %s654, 4
        %s656 = scalar_lea.vmem %s2, %s655
        %p657 = scmp.lt.s32.totalorder %s38, 1
        %s658 = scalar_select %p657, %s38, 1
        %s659 = scalar_lea.vmem %s4, %s658
        %p660 = scmp.lt.s32.totalorder %s38, 1
        %s661 = scalar_select %p660, %s38, 1
        %s662 = scalar_lea.vmem %s5, %s661
        %p663 = scmp.lt.s32.totalorder %s38, 1
        %s664 = scalar_select %p663, %s38, 1
        %s665 = scalar_lea.vmem %s6, %s664
        %p666 = scmp.lt.s32.totalorder %s38, 1
        %s667 = scalar_select %p666, %s38, 1
        %s668 = scalar_lea.vmem %s8, %s667
        %p669 = scmp.lt.s32.totalorder %s38, 1
        %s670 = scalar_select %p669, %s38, 1
        %s671 = smul.addr %s670, 8
        %s672 = smul.addr %s671, 4
        %s673 = scalar_lea.vmem %s9, %s672
        %p674 = scmp.lt.s32.totalorder %s38, 1
        %s675 = scalar_select %p674, %s38, 1
        %s676 = scalar_lea.vmem %s10, %s675
        %p677 = scmp.lt.s32.totalorder %s38, 1
        %s678 = scalar_select %p677, %s38, 1
        %s679 = scalar_lea.vmem %s11, %s678
        %p680 = scmp.lt.s32.totalorder %s38, 1
        %s681 = scalar_select %p680, %s38, 1
        %s682 = scalar_lea.vmem %s12, %s681
        %p684 = scmp.eq.s32.totalorder %s38, 0
        // Predicated region
        $region85: #{tpu_custom_call.1} parent=71 // pred_check
          %p685 = pneg %p684
        $region86: #{tpu_custom_call.1} parent=71 // pred_check_branch
          %687 = sbr.rel (%p685) target = $region88
        $region87: #{tpu_custom_call.1} parent=71 // pred_region
          %v688 = vld [vmem:[%s550] sm:$0xff]
          %vm689 = vcmask 261120
          %690 = vst.msk [vmem:[%s651] sm:$0xff] %vm689, %v688
        $region88: #{tpu_custom_call.1} parent=71 // pred_fallthru
          _
        %v691 = vld [vmem:[%s651] sm:$0xff]
        %v692 = vpack.c.bf16 %v691, %v691
        %v693 = vld [vmem:[%s656] sm:$0xff]
        %v694 = vld [vmem:[%s656 + $0x8] sm:$0xf]
        %v695 = vld [vmem:[%s656 + $0xc] sm:$0xff]
        %v696 = vld [vmem:[%s656 + $0x14] sm:$0xf]
        %v697 = vld [vmem:[%s656 + $0x18] sm:$0xff]
        %v698 = vld [vmem:[%s656 + $0x20] sm:$0xf]
        %v699 = vld [vmem:[%s656 + $0x24] sm:$0xff]
        %v700 = vld [vmem:[%s656 + $0x2c] sm:$0xf]
        %v709 = vunpack.c.l.b16 %v693
        %v710 = vunpack.c.h.b16 %v693
        %v711 = vunpack.c.l.b16 %v694
        %v712 = vunpack.c.l.b16 %v695
        %v713 = vunpack.c.h.b16 %v695
        %v714 = vunpack.c.l.b16 %v696
        %v715 = vunpack.c.l.b16 %v697
        %v716 = vunpack.c.h.b16 %v697
        %v717 = vunpack.c.l.b16 %v698
        %v718 = vunpack.c.l.b16 %v699
        %v719 = vunpack.c.h.b16 %v699
        %v720 = vunpack.c.l.b16 %v700
        %v721 = vpack.c.b16 %v712, %v709
        %v722 = vpack.c.b16 %v713, %v710
        %v723 = vpack.c.b16 %v714, %v711
        %v724 = vpack.c.b16 %v718, %v715
        %v725 = vpack.c.b16 %v719, %v716
        %v726 = vpack.c.b16 %v720, %v717
        %vm733 = vcmask 261120
        %v735 = vsel %vm733, %v692, 0
        %737 = vmatprep.subr.bf16.mxu0 %v722
        %738 = vmatpush1.bf16.msra.mxu0 %v721
        %739 = vmatprep.subr.bf16.mxu0 %v725
        %740 = vmatpush1.bf16.msra.mxu0 %v724
        %741 = vmatprep.subr.bf16.mxu0 0
        %742 = vmatpush1.bf16.msra.mxu0 0
        %743 = vmatprep.subr.bf16.mxu0 0
        %744 = vmatpush1.bf16.msra.mxu0 0
        %745 = vmatprep.subr.bf16.mxu0 0
        %746 = vmatpush1.bf16.msra.mxu0 0
        %747 = vmatprep.subr.bf16.mxu0 0
        %748 = vmatpush1.bf16.msra.mxu0 0
        %749 = vmatprep.subr.bf16.mxu0 0
        %750 = vmatpush1.bf16.msra.mxu0 0
        %751 = vmatprep.subr.bf16.mxu0 0
        %752 = vmatpush1.bf16.msra.mxu0 0
        %753 = vmatprep.subr.bf16.mxu0 0
        %754 = vmatpush1.bf16.msra.mxu0 0
        %755 = vmatprep.subr.bf16.mxu0 0
        %756 = vmatpush1.bf16.msra.mxu0 0
        %757 = vmatprep.subr.bf16.mxu0 0
        %758 = vmatpush1.bf16.msra.mxu0 0
        %759 = vmatprep.subr.bf16.mxu0 0
        %760 = vmatpush1.bf16.msra.mxu0 0
        %761 = vmatprep.subr.bf16.mxu0 0
        %762 = vmatpush1.bf16.msra.mxu0 0
        %763 = vmatprep.subr.bf16.mxu0 0
        %764 = vmatpush1.bf16.msra.mxu0 0
        %765 = vmatprep.subr.bf16.mxu0 0
        %766 = vmatpush1.bf16.msra.mxu0 0
        %767 = vmatprep.subr.bf16.mxu0 0
        %768 = vmatpush1.bf16.msra.mxu0 0
        %769 = vmatprep.mubr.bf16.mxu0 0
        %770 = vmatmul.mubr.bf16.gmra.mrb[0].mxu0 %v735
        %v771 = vpop.f32.mrb[0].mxu0
        %v772 = vadd.f32 0.0, %v771
        %v773 = vpop.f32.mrb[0].mxu0
        %v774 = vadd.f32 0.0, %v773
        %v775 = vpop.f32.mrb[0].mxu0
        %v776 = vpop.f32.mrb[0].mxu0
        %777 = vdwg.mxu0
        %778 = vmatprep.subr.bf16.mxu0 0
        %779 = vmatpush1.bf16.msra.mxu0 %v723
        %780 = vmatprep.subr.bf16.mxu0 0
        %781 = vmatpush1.bf16.msra.mxu0 %v726
        %782 = vmatprep.subr.bf16.mxu0 0
        %783 = vmatpush1.bf16.msra.mxu0 0
        %784 = vmatprep.subr.bf16.mxu0 0
        %785 = vmatpush1.bf16.msra.mxu0 0
        %786 = vmatprep.subr.bf16.mxu0 0
        %787 = vmatpush1.bf16.msra.mxu0 0
        %788 = vmatprep.subr.bf16.mxu0 0
        %789 = vmatpush1.bf16.msra.mxu0 0
        %790 = vmatprep.subr.bf16.mxu0 0
        %791 = vmatpush1.bf16.msra.mxu0 0
        %792 = vmatprep.subr.bf16.mxu0 0
        %793 = vmatpush1.bf16.msra.mxu0 0
        %794 = vmatprep.subr.bf16.mxu0 0
        %795 = vmatpush1.bf16.msra.mxu0 0
        %796 = vmatprep.subr.bf16.mxu0 0
        %797 = vmatpush1.bf16.msra.mxu0 0
        %798 = vmatprep.subr.bf16.mxu0 0
        %799 = vmatpush1.bf16.msra.mxu0 0
        %800 = vmatprep.subr.bf16.mxu0 0
        %801 = vmatpush1.bf16.msra.mxu0 0
        %802 = vmatprep.subr.bf16.mxu0 0
        %803 = vmatpush1.bf16.msra.mxu0 0
        %804 = vmatprep.subr.bf16.mxu0 0
        %805 = vmatpush1.bf16.msra.mxu0 0
        %806 = vmatprep.subr.bf16.mxu0 0
        %807 = vmatpush1.bf16.msra.mxu0 0
        %808 = vmatprep.subr.bf16.mxu0 0
        %809 = vmatpush1.bf16.msra.mxu0 0
        %810 = vmatprep.mubr.bf16.mxu0 0
        %811 = vmatmul.mubr.bf16.gmra.mrb[0].mxu0 %v735
        %v812 = vpop.f32.mrb[0].mxu0
        %v813 = vadd.f32 0.0, %v812
        %v814 = vpop.f32.mrb[0].mxu0
        %v815 = vpop.f32.mrb[0].mxu0
        %v816 = vpop.f32.mrb[0].mxu0
        %817 = vdwg.mxu0
        %v818 = vpack.c.bf16 %v772, %v772
        %v819 = vpack.c.bf16 %v774, %v774
        %v820 = vpack.c.bf16 %v813, %v813
        %v821 = vld [vmem:[%s1] sm:$0x1]
        %v822 = vld [vmem:[%s1 + $0x1] sm:$0x1]
        %v823 = vld [vmem:[%s1 + $0x2] sm:$0x1]
        %v824 = vld [vmem:[%s1 + $0x3] sm:$0x1]
        %v826 = vpack.i.b16 %v821, %v821
        %v828 = vlaneseq
        %v829 = vshrl.u32 %v828, 7
        %v830 = vsub.s32 0, %v829
        %v831 = vrot.slane %v826, %v830
        %v833 = vpack.i.b16 %v822, %v822
        %v835 = vlaneseq
        %v836 = vshrl.u32 %v835, 7
        %v837 = vsub.s32 0, %v836
        %v838 = vrot.slane %v833, %v837
        %v840 = vpack.i.b16 %v823, %v823
        %v842 = vlaneseq
        %v843 = vshrl.u32 %v842, 7
        %v844 = vsub.s32 0, %v843
        %v845 = vrot.slane %v840, %v844
        %v847 = vpack.i.b16 %v824, %v824
        %v849 = vlaneseq
        %v850 = vshrl.u32 %v849, 7
        %v851 = vsub.s32 0, %v850
        %v852 = vrot.slane %v847, %v851
        %v853 = vmul.bf16 %v819, %v831
        %v854 = vmul.bf16 %v819, %v838
        %v855 = vmul.bf16 %v819, %v845
        %v856 = vmul.bf16 %v819, %v852
        %v857 = vmul.bf16 %v820, %v831
        %v858 = vmul.bf16 %v820, %v838
        %v859 = vmul.bf16 %v820, %v845
        %v860 = vmul.bf16 %v820, %v852
        %v865 = vunpack.c.l.b16 %v853
        %v866 = vunpack.c.l.b16 %v854
        %v867 = vunpack.c.l.b16 %v855
        %v868 = vunpack.c.l.b16 %v856
        %v869 = vpack.c.b16 %v866, %v865
        %v870 = vpack.c.b16 %v868, %v867
        %v872 = vsel %vm733, %v869, 0
        %v875 = vsel %vm733, %v870, 0
        %v878 = vsel %vm733, %v818, 0
        %880 = vmatprep.subr.bf16.mxu0 0
        %881 = vmatpush1.bf16.xpose.msra.mxu0 %v878
        %882 = vmatprep.subr.bf16.mxu0 0
        %883 = vmatpush1.bf16.xpose.msra.mxu0 0
        %884 = vmatprep.subr.bf16.mxu0 0
        %885 = vmatpush1.bf16.xpose.msra.mxu0 0
        %886 = vmatprep.subr.bf16.mxu0 0
        %887 = vmatpush1.bf16.xpose.msra.mxu0 0
        %888 = vmatprep.subr.bf16.mxu0 0
        %889 = vmatpush1.bf16.xpose.msra.mxu0 0
        %890 = vmatprep.subr.bf16.mxu0 0
        %891 = vmatpush1.bf16.xpose.msra.mxu0 0
        %892 = vmatprep.subr.bf16.mxu0 0
        %893 = vmatpush1.bf16.xpose.msra.mxu0 0
        %894 = vmatprep.subr.bf16.mxu0 0
        %895 = vmatpush1.bf16.xpose.msra.mxu0 0
        %896 = vmatprep.subr.bf16.mxu0 0
        %897 = vmatpush1.bf16.xpose.msra.mxu0 0
        %898 = vmatprep.subr.bf16.mxu0 0
        %899 = vmatpush1.bf16.xpose.msra.mxu0 0
        %900 = vmatprep.subr.bf16.mxu0 0
        %901 = vmatpush1.bf16.xpose.msra.mxu0 0
        %902 = vmatprep.subr.bf16.mxu0 0
        %903 = vmatpush1.bf16.xpose.msra.mxu0 0
        %904 = vmatprep.subr.bf16.mxu0 0
        %905 = vmatpush1.bf16.xpose.msra.mxu0 0
        %906 = vmatprep.subr.bf16.mxu0 0
        %907 = vmatpush1.bf16.xpose.msra.mxu0 0
        %908 = vmatprep.subr.bf16.mxu0 0
        %909 = vmatpush1.bf16.xpose.msra.mxu0 0
        %910 = vmatprep.subr.bf16.mxu0 0
        %911 = vmatpush1.bf16.xpose.msra.mxu0 0
        %912 = vmatprep.mubr.bf16.mxu0 0
        %913 = vmatmul.mubr.bf16.gmra.mrb[0].mxu0 %v872
        %v914 = vpop.f32.mrb[0].mxu0
        %v915 = vadd.f32 0.0, %v914
        %v916 = vpop.f32.mrb[0].mxu0
        %v917 = vpop.f32.mrb[0].mxu0
        %v918 = vadd.f32 0.0, %v917
        %v919 = vpop.f32.mrb[0].mxu0
        %920 = vmatprep.mubr.bf16.mxu0 0
        %921 = vmatmul.mubr.bf16.gmra.mrb[0].mxu0 %v875
        %v922 = vpop.f32.mrb[0].mxu0
        %v923 = vadd.f32 0.0, %v922
        %v924 = vpop.f32.mrb[0].mxu0
        %v925 = vpop.f32.mrb[0].mxu0
        %v926 = vadd.f32 0.0, %v925
        %v927 = vpop.f32.mrb[0].mxu0
        %928 = vdwg.mxu0
        %vm929 = vcmask 64512
        %v930 = vsel %vm929, %v915, -inf
        %v931 = vrot.slane %v930, 4
        %v932 = vmax.f32 %v930, %v931
        %v933 = vrot.slane %v932, 2
        %v934 = vmax.f32 %v932, %v933
        %v935 = vrot.slane %v934, 1
        %v936 = vmax.f32 %v934, %v935
        %v937 = vsel %vm929, %v918, -inf
        %v938 = vrot.slane %v937, 4
        %v939 = vmax.f32 %v937, %v938
        %v940 = vrot.slane %v939, 2
        %v941 = vmax.f32 %v939, %v940
        %v942 = vrot.slane %v941, 1
        %v943 = vmax.f32 %v941, %v942
        %v944 = vsel %vm929, %v923, -inf
        %v945 = vrot.slane %v944, 4
        %v946 = vmax.f32 %v944, %v945
        %v947 = vrot.slane %v946, 2
        %v948 = vmax.f32 %v946, %v947
        %v949 = vrot.slane %v948, 1
        %v950 = vmax.f32 %v948, %v949
        %v951 = vsel %vm929, %v926, -inf
        %v952 = vrot.slane %v951, 4
        %v953 = vmax.f32 %v951, %v952
        %v954 = vrot.slane %v953, 2
        %v955 = vmax.f32 %v953, %v954
        %v956 = vrot.slane %v955, 1
        %v957 = vmax.f32 %v955, %v956
        %v958 = vsub.f32 %v915, %v936
        %v959 = vsub.f32 %v918, %v943
        %v960 = vsub.f32 %v923, %v950
        %v961 = vsub.f32 %v926, %v957
        %v962 = vmul.f32 %v958, 1.442695
        %v963 = vpow.pop %v962
        %v964 = vmul.f32 %v959, 1.442695
        %v965 = vpow.pop %v964
        %v966 = vmul.f32 %v960, 1.442695
        %v967 = vpow.pop %v966
        %v968 = vmul.f32 %v961, 1.442695
        %v969 = vpow.pop %v968
        %v970 = vsel %vm929, %v963, 0.0
        %v971 = vrot.slane %v970, 4
        %v972 = vadd.f32 %v970, %v971
        %v973 = vrot.slane %v972, 2
        %v974 = vadd.f32 %v972, %v973
        %v975 = vrot.slane %v974, 1
        %v976 = vadd.f32 %v974, %v975
        %v977 = vsel %vm929, %v965, 0.0
        %v978 = vrot.slane %v977, 4
        %v979 = vadd.f32 %v977, %v978
        %v980 = vrot.slane %v979, 2
        %v981 = vadd.f32 %v979, %v980
        %v982 = vrot.slane %v981, 1
        %v983 = vadd.f32 %v981, %v982
        %v984 = vsel %vm929, %v967, 0.0
        %v985 = vrot.slane %v984, 4
        %v986 = vadd.f32 %v984, %v985
        %v987 = vrot.slane %v986, 2
        %v988 = vadd.f32 %v986, %v987
        %v989 = vrot.slane %v988, 1
        %v990 = vadd.f32 %v988, %v989
        %v991 = vsel %vm929, %v969, 0.0
        %v992 = vrot.slane %v991, 4
        %v993 = vadd.f32 %v991, %v992
        %v994 = vrot.slane %v993, 2
        %v995 = vadd.f32 %v993, %v994
        %v996 = vrot.slane %v995, 1
        %v997 = vadd.f32 %v995, %v996
        %v998 = vrcp.pop %v976
        %v999 = vrcp.pop %v983
        %v1000 = vrcp.pop %v990
        %v1001 = vrcp.pop %v997
        %v1002 = vmul.f32 %v963, %v998
        %v1003 = vmul.f32 %v965, %v999
        %v1004 = vmul.f32 %v967, %v1000
        %v1005 = vmul.f32 %v969, %v1001
        %v1006 = vpack.c.bf16 %v1003, %v1002
        %v1007 = vpack.c.bf16 %v1005, %v1004
        %1008 = vxpose.xlu0.c.b16.start [1/8] %v1006, 128
        %1009 = vxpose.xlu0.c.b16.cont [2/8] %v1007, 128
        %1010 = vxpose.xlu0.c.b16.cont [3/8] 0, 128
        %1011 = vxpose.xlu0.c.b16.cont [4/8] 0, 128
        %1012 = vxpose.xlu0.c.b16.cont [5/8] 0, 128
        %1013 = vxpose.xlu0.c.b16.cont [6/8] 0, 128
        %1014 = vxpose.xlu0.c.b16.cont [7/8] 0, 128
        %1015 = vxpose.xlu0.c.b16.end [8/8] 0, 128
        %v1016 = vpop.trf.xlu0
        %v1017 = vpop.trf.xlu0
        %v1018 = vpop.trf.xlu0
        %v1019 = vpop.trf.xlu0
        %v1020 = vpop.trf.xlu0
        %v1021 = vpop.trf.xlu0
        %v1022 = vpop.trf.xlu0
        %v1023 = vpop.trf.xlu0
        %v1028 = vunpack.c.l.b16 %v857
        %v1029 = vunpack.c.l.b16 %v858
        %v1030 = vunpack.c.l.b16 %v859
        %v1031 = vunpack.c.l.b16 %v860
        %v1032 = vpack.c.b16 %v1029, %v1028
        %v1033 = vpack.c.b16 %v1031, %v1030
        %v1037 = vsel %vm733, %v1016, 0
        %1039 = vmatprep.subr.bf16.mxu0 0
        %1040 = vmatpush1.bf16.msra.mxu0 %v1032
        %1041 = vmatprep.subr.bf16.mxu0 0
        %1042 = vmatpush1.bf16.msra.mxu0 %v1033
        %1043 = vmatprep.subr.bf16.mxu0 0
        %1044 = vmatpush1.bf16.msra.mxu0 0
        %1045 = vmatprep.subr.bf16.mxu0 0
        %1046 = vmatpush1.bf16.msra.mxu0 0
        %1047 = vmatprep.subr.bf16.mxu0 0
        %1048 = vmatpush1.bf16.msra.mxu0 0
        %1049 = vmatprep.subr.bf16.mxu0 0
        %1050 = vmatpush1.bf16.msra.mxu0 0
        %1051 = vmatprep.subr.bf16.mxu0 0
        %1052 = vmatpush1.bf16.msra.mxu0 0
        %1053 = vmatprep.subr.bf16.mxu0 0
        %1054 = vmatpush1.bf16.msra.mxu0 0
        %1055 = vmatprep.subr.bf16.mxu0 0
        %1056 = vmatpush1.bf16.msra.mxu0 0
        %1057 = vmatprep.subr.bf16.mxu0 0
        %1058 = vmatpush1.bf16.msra.mxu0 0
        %1059 = vmatprep.subr.bf16.mxu0 0
        %1060 = vmatpush1.bf16.msra.mxu0 0
        %1061 = vmatprep.subr.bf16.mxu0 0
        %1062 = vmatpush1.bf16.msra.mxu0 0
        %1063 = vmatprep.subr.bf16.mxu0 0
        %1064 = vmatpush1.bf16.msra.mxu0 0
        %1065 = vmatprep.subr.bf16.mxu0 0
        %1066 = vmatpush1.bf16.msra.mxu0 0
        %1067 = vmatprep.subr.bf16.mxu0 0
        %1068 = vmatpush1.bf16.msra.mxu0 0
        %1069 = vmatprep.subr.bf16.mxu0 0
        %1070 = vmatpush1.bf16.msra.mxu0 0
        %1071 = vmatprep.mubr.bf16.mxu0 0
        %1072 = vmatmul.mubr.bf16.gmra.mrb[0].mxu0 %v1037
        %v1073 = vpop.f32.mrb[0].mxu0
        %v1074 = vadd.f32 0.0, %v1073
        %v1075 = vpop.f32.mrb[0].mxu0
        %v1076 = vpop.f32.mrb[0].mxu0
        %v1077 = vpop.f32.mrb[0].mxu0
        %1078 = vdwg.mxu0
        %v1079 = vpack.c.bf16 %v1074, %v1074
        %v1080 = vld [vmem:[%s559] sm:$0xf]
        %v1081 = vld [vmem:[%s559 + $0x4] sm:$0xf]
        %v1082 = vld [vmem:[%s559 + $0x8] sm:$0xf]
        %v1083 = vld [vmem:[%s559 + $0xc] sm:$0xf]
        %v1084 = vld [vmem:[%s659] sm:$0x1]
        %v1086 = vlaneseq
        %v1087 = vshrl.u32 %v1086, 7
        %v1088 = vsub.s32 0, %v1087
        %v1089 = vrot.slane %v1084, %v1088
        %v1095 = vunpack.c.l.b16 %v1080
        %v1096 = vunpack.c.l.b16 %v1081
        %v1097 = vunpack.c.l.b16 %v1082
        %v1098 = vunpack.c.l.b16 %v1083
        %v1099 = vpack.c.b16 %v1096, %v1095
        %v1100 = vpack.c.b16 %v1098, %v1097
        %v1104 = vsel %vm733, %v1079, 0
        %1106 = vmatprep.subr.bf16.mxu0 0
        %1107 = vmatpush1.bf16.msra.mxu0 %v1099
        %1108 = vmatprep.subr.bf16.mxu0 0
        %1109 = vmatpush1.bf16.msra.mxu0 %v1100
        %1110 = vmatprep.subr.bf16.mxu0 0
        %1111 = vmatpush1.bf16.msra.mxu0 0
        %1112 = vmatprep.subr.bf16.mxu0 0
        %1113 = vmatpush1.bf16.msra.mxu0 0
        %1114 = vmatprep.subr.bf16.mxu0 0
        %1115 = vmatpush1.bf16.msra.mxu0 0
        %1116 = vmatprep.subr.bf16.mxu0 0
        %1117 = vmatpush1.bf16.msra.mxu0 0
        %1118 = vmatprep.subr.bf16.mxu0 0
        %1119 = vmatpush1.bf16.msra.mxu0 0
        %1120 = vmatprep.subr.bf16.mxu0 0
        %1121 = vmatpush1.bf16.msra.mxu0 0
        %1122 = vmatprep.subr.bf16.mxu0 0
        %1123 = vmatpush1.bf16.msra.mxu0 0
        %1124 = vmatprep.subr.bf16.mxu0 0
        %1125 = vmatpush1.bf16.msra.mxu0 0
        %1126 = vmatprep.subr.bf16.mxu0 0
        %1127 = vmatpush1.bf16.msra.mxu0 0
        %1128 = vmatprep.subr.bf16.mxu0 0
        %1129 = vmatpush1.bf16.msra.mxu0 0
        %1130 = vmatprep.subr.bf16.mxu0 0
        %1131 = vmatpush1.bf16.msra.mxu0 0
        %1132 = vmatprep.subr.bf16.mxu0 0
        %1133 = vmatpush1.bf16.msra.mxu0 0
        %1134 = vmatprep.subr.bf16.mxu0 0
        %1135 = vmatpush1.bf16.msra.mxu0 0
        %1136 = vmatprep.subr.bf16.mxu0 0
        %1137 = vmatpush1.bf16.msra.mxu0 0
        %1138 = vmatprep.mubr.bf16.mxu0 0
        %1139 = vmatmul.mubr.bf16.gmra.mrb[0].mxu0 %v1104
        %v1140 = vpop.f32.mrb[0].mxu0
        %v1141 = vadd.f32 %v1089, %v1140
        %v1142 = vpop.f32.mrb[0].mxu0
        %v1143 = vpop.f32.mrb[0].mxu0
        %v1144 = vpop.f32.mrb[0].mxu0
        %1145 = vdwg.mxu0
        %v1146 = vadd.f32 %v1141, %v691
        %v1147 = vld [vmem:[%s662] sm:$0x1]
        %v1148 = vld [vmem:[%s665] sm:$0x1]
        %v1149 = vsel %vm733, %v1146, 0.0
        %1150 = vadd.xlane.f32.xlu0 %v1149
        %v1151 = vpop.xlane.xlu0 %1150
        %v1152 = vrcp.pop 32.0
        %v1153 = vmul.f32 %v1151, %v1152
        %v1154 = vsub.f32 %v1146, %v1153
        %v1155 = vmul.f32 %v1154, %v1154
        %v1156 = vsel %vm733, %v1155, 0.0
        %1157 = vadd.xlane.f32.xlu0 %v1156
        %v1158 = vpop.xlane.xlu0 %1157
        %v1159 = vmul.f32 %v1158, %v1152
        %v1160 = vadd.f32 %v1159, 1e-05
        %v1161 = vrsqrt.pop %v1160
        %v1162 = vmul.f32 %v1154, %v1161
        %v1164 = vlaneseq
        %v1165 = vshrl.u32 %v1164, 7
        %v1166 = vsub.s32 0, %v1165
        %v1167 = vrot.slane %v1147, %v1166
        %v1169 = vmul.f32 %v1162, %v1167
        %v1171 = vlaneseq
        %v1172 = vshrl.u32 %v1171, 7
        %v1173 = vsub.s32 0, %v1172
        %v1174 = vrot.slane %v1148, %v1173
        %v1176 = vadd.f32 %v1169, %v1174
        %v1177 = vpack.c.bf16 %v1176, %v1176
        %v1178 = vld [vmem:[%s568] sm:$0xf]
        %v1179 = vld [vmem:[%s568 + $0x4] sm:$0xf]
        %v1180 = vld [vmem:[%s568 + $0x8] sm:$0xf]
        %v1181 = vld [vmem:[%s568 + $0xc] sm:$0xf]
        %v1182 = vld [vmem:[%s668] sm:$0x1]
        %v1184 = vlaneseq
        %v1185 = vshrl.u32 %v1184, 7
        %v1186 = vsub.s32 0, %v1185
        %v1187 = vrot.slane %v1182, %v1186
        %v1193 = vunpack.c.l.b16 %v1178
        %v1194 = vunpack.c.l.b16 %v1179
        %v1195 = vunpack.c.l.b16 %v1180
        %v1196 = vunpack.c.l.b16 %v1181
        %v1197 = vpack.c.b16 %v1194, %v1193
        %v1198 = vpack.c.b16 %v1196, %v1195
        %v1202 = vsel %vm733, %v1177, 0
        %1204 = vmatprep.subr.bf16.mxu0 0
        %1205 = vmatpush1.bf16.msra.mxu0 %v1197
        %1206 = vmatprep.subr.bf16.mxu0 0
        %1207 = vmatpush1.bf16.msra.mxu0 %v1198
        %1208 = vmatprep.subr.bf16.mxu0 0
        %1209 = vmatpush1.bf16.msra.mxu0 0
        %1210 = vmatprep.subr.bf16.mxu0 0
        %1211 = vmatpush1.bf16.msra.mxu0 0
        %1212 = vmatprep.subr.bf16.mxu0 0
        %1213 = vmatpush1.bf16.msra.mxu0 0
        %1214 = vmatprep.subr.bf16.mxu0 0
        %1215 = vmatpush1.bf16.msra.mxu0 0
        %1216 = vmatprep.subr.bf16.mxu0 0
        %1217 = vmatpush1.bf16.msra.mxu0 0
        %1218 = vmatprep.subr.bf16.mxu0 0
        %1219 = vmatpush1.bf16.msra.mxu0 0
        %1220 = vmatprep.subr.bf16.mxu0 0
        %1221 = vmatpush1.bf16.msra.mxu0 0
        %1222 = vmatprep.subr.bf16.mxu0 0
        %1223 = vmatpush1.bf16.msra.mxu0 0
        %1224 = vmatprep.subr.bf16.mxu0 0
        %1225 = vmatpush1.bf16.msra.mxu0 0
        %1226 = vmatprep.subr.bf16.mxu0 0
        %1227 = vmatpush1.bf16.msra.mxu0 0
        %1228 = vmatprep.subr.bf16.mxu0 0
        %1229 = vmatpush1.bf16.msra.mxu0 0
        %1230 = vmatprep.subr.bf16.mxu0 0
        %1231 = vmatpush1.bf16.msra.mxu0 0
        %1232 = vmatprep.subr.bf16.mxu0 0
        %1233 = vmatpush1.bf16.msra.mxu0 0
        %1234 = vmatprep.subr.bf16.mxu0 0
        %1235 = vmatpush1.bf16.msra.mxu0 0
        %1236 = vmatprep.mubr.bf16.mxu0 0
        %1237 = vmatmul.mubr.bf16.gmra.mrb[0].mxu0 %v1202
        %v1238 = vpop.f32.mrb[0].mxu0
        %v1239 = vadd.f32 %v1187, %v1238
        %v1240 = vpop.f32.mrb[0].mxu0
        %v1241 = vpop.f32.mrb[0].mxu0
        %v1242 = vpop.f32.mrb[0].mxu0
        %1243 = vdwg.mxu0
        %v1244 = vmax.f32 %v1239, 0.0
        %v1245 = vpack.c.bf16 %v1244, %v1244
        %v1246 = vld [vmem:[%s673] sm:$0xf]
        %v1247 = vld [vmem:[%s673 + $0x4] sm:$0xf]
        %v1248 = vld [vmem:[%s673 + $0x8] sm:$0xf]
        %v1249 = vld [vmem:[%s673 + $0xc] sm:$0xf]
        %v1250 = vld [vmem:[%s673 + $0x10] sm:$0xf]
        %v1251 = vld [vmem:[%s673 + $0x14] sm:$0xf]
        %v1252 = vld [vmem:[%s673 + $0x18] sm:$0xf]
        %v1253 = vld [vmem:[%s673 + $0x1c] sm:$0xf]
        %v1254 = vld [vmem:[%s676] sm:$0x1]
        %v1256 = vlaneseq
        %v1257 = vshrl.u32 %v1256, 7
        %v1258 = vsub.s32 0, %v1257
        %v1259 = vrot.slane %v1254, %v1258
        %v1269 = vunpack.c.l.b16 %v1246
        %v1270 = vunpack.c.l.b16 %v1247
        %v1271 = vunpack.c.l.b16 %v1248
        %v1272 = vunpack.c.l.b16 %v1249
        %v1273 = vunpack.c.l.b16 %v1250
        %v1274 = vunpack.c.l.b16 %v1251
        %v1275 = vunpack.c.l.b16 %v1252
        %v1276 = vunpack.c.l.b16 %v1253
        %v1277 = vpack.c.b16 %v1270, %v1269
        %v1278 = vpack.c.b16 %v1272, %v1271
        %v1279 = vpack.c.b16 %v1274, %v1273
        %v1280 = vpack.c.b16 %v1276, %v1275
        %vm1285 = vcmask 523264
        %v1287 = vsel %vm1285, %v1245, 0
        %1289 = vmatprep.subr.bf16.mxu0 0
        %1290 = vmatpush1.bf16.msra.mxu0 %v1277
        %1291 = vmatprep.subr.bf16.mxu0 0
        %1292 = vmatpush1.bf16.msra.mxu0 %v1278
        %1293 = vmatprep.subr.bf16.mxu0 0
        %1294 = vmatpush1.bf16.msra.mxu0 %v1279
        %1295 = vmatprep.subr.bf16.mxu0 0
        %1296 = vmatpush1.bf16.msra.mxu0 %v1280
        %1297 = vmatprep.subr.bf16.mxu0 0
        %1298 = vmatpush1.bf16.msra.mxu0 0
        %1299 = vmatprep.subr.bf16.mxu0 0
        %1300 = vmatpush1.bf16.msra.mxu0 0
        %1301 = vmatprep.subr.bf16.mxu0 0
        %1302 = vmatpush1.bf16.msra.mxu0 0
        %1303 = vmatprep.subr.bf16.mxu0 0
        %1304 = vmatpush1.bf16.msra.mxu0 0
        %1305 = vmatprep.subr.bf16.mxu0 0
        %1306 = vmatpush1.bf16.msra.mxu0 0
        %1307 = vmatprep.subr.bf16.mxu0 0
        %1308 = vmatpush1.bf16.msra.mxu0 0
        %1309 = vmatprep.subr.bf16.mxu0 0
        %1310 = vmatpush1.bf16.msra.mxu0 0
        %1311 = vmatprep.subr.bf16.mxu0 0
        %1312 = vmatpush1.bf16.msra.mxu0 0
        %1313 = vmatprep.subr.bf16.mxu0 0
        %1314 = vmatpush1.bf16.msra.mxu0 0
        %1315 = vmatprep.subr.bf16.mxu0 0
        %1316 = vmatpush1.bf16.msra.mxu0 0
        %1317 = vmatprep.subr.bf16.mxu0 0
        %1318 = vmatpush1.bf16.msra.mxu0 0
        %1319 = vmatprep.subr.bf16.mxu0 0
        %1320 = vmatpush1.bf16.msra.mxu0 0
        %1321 = vmatprep.mubr.bf16.mxu0 0
        %1322 = vmatmul.mubr.bf16.gmra.mrb[0].mxu0 %v1287
        %v1323 = vpop.f32.mrb[0].mxu0
        %v1324 = vadd.f32 %v1259, %v1323
        %v1325 = vpop.f32.mrb[0].mxu0
        %v1326 = vpop.f32.mrb[0].mxu0
        %v1327 = vpop.f32.mrb[0].mxu0
        %1328 = vdwg.mxu0
        %v1329 = vadd.f32 %v1324, %v1176
        %v1330 = vld [vmem:[%s679] sm:$0x1]
        %v1331 = vld [vmem:[%s682] sm:$0x1]
        %v1332 = vsel %vm733, %v1329, 0.0
        %1333 = vadd.xlane.f32.xlu0 %v1332
        %v1334 = vpop.xlane.xlu0 %1333
        %v1335 = vmul.f32 %v1334, %v1152
        %v1336 = vsub.f32 %v1329, %v1335
        %v1337 = vmul.f32 %v1336, %v1336
        %v1338 = vsel %vm733, %v1337, 0.0
        %1339 = vadd.xlane.f32.xlu0 %v1338
        %v1340 = vpop.xlane.xlu0 %1339
        %v1341 = vmul.f32 %v1340, %v1152
        %v1342 = vadd.f32 %v1341, 1e-05
        %v1343 = vrsqrt.pop %v1342
        %v1344 = vmul.f32 %v1336, %v1343
        %v1346 = vlaneseq
        %v1347 = vshrl.u32 %v1346, 7
        %v1348 = vsub.s32 0, %v1347
        %v1349 = vrot.slane %v1330, %v1348
        %v1351 = vmul.f32 %v1344, %v1349
        %v1353 = vlaneseq
        %v1354 = vshrl.u32 %v1353, 7
        %v1355 = vsub.s32 0, %v1354
        %v1356 = vrot.slane %v1331, %v1355
        %v1358 = vadd.f32 %v1351, %v1356
        %1359 = vst.msk [vmem:[%s651] sm:$0xff] %vm733, %v1358
        %s1360 = sand.u32 %s386, 1
        %s1361 = scalar_lea.sflag [#allocation4], %s1360
        %s1362 = sand.u32 %s386, 1
        %s1363 = smul.addr %s1362, 8
        %s1364 = scalar_lea.vmem [#allocation8], %s1363
        // Predicated region
        $region89: #{tpu_custom_call.1} parent=71 // pred_check
          %p1365 = pneg %p396
        $region90: #{tpu_custom_call.1} parent=71 // pred_check_branch
          %1367 = sbr.rel (%p1365) target = $region92
        $region91: #{tpu_custom_call.1} parent=71 // pred_region
          %s1369 = ssub.s32 128, 128
          %1370 = vsyncadd %s1361, %s1369
          %s1371 = smul.addr %s37, 128
          %s1372 = scalar_lea.hbm %s13, %s1371
          %s1374 = sshll.u32 %s1364, 4
          %s1375 = int_to_ptr.vmem [resolvable:$true] %s1374
          %1377 = dma.vmem_to_hbm [thread:$0]  %s1375, 128, %s1372, %s1361
        $region92: #{tpu_custom_call.1} parent=71 // pred_fallthru
          _
      $region72: #{tpu_custom_call.1} parent=5 // pred_fallthru
        _
      %p1378 = scmp.le.s32.totalorder 2, %s28
      // Predicated region
      $region93: #{tpu_custom_call.1} parent=5 // pred_check
        %p1379 = pneg %p1378
      $region94: #{tpu_custom_call.1} parent=5 // pred_check_branch
        %1381 = sbr.rel (%p1379) target = $region96
      $region95: #{tpu_custom_call.1} parent=5 // pred_region
        %s1382 = ssub.s32 %s28, 2
        // Predicated region
        $region97: #{tpu_custom_call.1} parent=95 // pred_check
          %p1383 = pneg %p402
        $region98: #{tpu_custom_call.1} parent=95 // pred_check_branch
          %1385 = sbr.rel (%p1383) target = $region100
        $region99: #{tpu_custom_call.1} parent=95 // pred_region
          %s1386 = sand.u32 %s387, 1
          %s1387 = scalar_lea.sflag [#allocation4], %s1386
          %s1388 = sand.u32 %s387, 1
          %s1389 = smul.addr %s1388, 8
          %s1390 = scalar_lea.vmem [#allocation8], %s1389
          %1391 = dma.done %s1387, 128
        $region100: #{tpu_custom_call.1} parent=95 // pred_fallthru
          _
      $region96: #{tpu_custom_call.1} parent=5 // pred_fallthru
        _
    $region6: #{tpu_custom_call.1} parent=1 // loop_footer
      %s32 = sadd.s32 1, %s28
    $region7: #{tpu_custom_call.1} parent=1 // loop_footer_branch
      %27 = sbr.rel target = $region3
    $region8: #{tpu_custom_call.1} parent=1 // loop_exit
      _
    %1392 = vsyncpa [#allocation3], 1
    %s1393 = scalar_lea.sflag [#allocation3], 1
    %1394 = vsyncpa %s1393, 1
    %1395 = vsyncpa [#allocation6], 1
    %s1396 = scalar_lea.sflag [#allocation6], 1
    %1397 = vsyncpa %s1396, 1
    %1398 = vsyncpa [#allocation4], 1
    %s1399 = scalar_lea.sflag [#allocation4], 1
    %1400 = vsyncpa %s1399, 1

</llo_original>
